<compile_context>
chip_gen: v7x
topology: tpu7x:2x2x1
jax: 0.10.0
libtpu: 0.0.40
codegen_flags: <defaults>
</compile_context>

<pallas_src>
import jax
import jax.numpy as jnp
from jax.experimental import pallas as pl
from jax.experimental.pallas import tpu as pltpu

EPS = 1e-5


def _make_kernel(p_valid: int):
    inv_p = 1.0 / float(p_valid)

    def _unpack(gb):
        # Extract gamma (col 0) / beta (col 1) from a packed (C, 2) array using a
        # masked lane-reduce (guaranteed lowering; avoids sub-lane-offset slices).
        sel = jax.lax.broadcasted_iota(jnp.int32, gb.shape, 1) == 0
        g = jnp.sum(jnp.where(sel, gb, 0.0), axis=1, keepdims=True)
        b = jnp.sum(jnp.where(sel, 0.0, gb), axis=1, keepdims=True)
        return g, b

    def kernel(x232_ref, x219_ref, g1b1_ref, w_ref, g2b2_ref, o_ref, y_ref):
        # x232/x219 : (CIN, P_PAD) f32, zero-padded past p_valid (resident, constant index)
        # g1b1      : (CIN, 2)   [gamma1 | beta1]
        # w_ref     : (CBLK, CIN)  conv-weight slab for this grid step
        # g2b2      : (CBLK, 2)  [gamma2 | beta2] slab
        # o_ref     : (CBLK, P_PAD)
        # y_ref     : VMEM scratch (CIN, P_PAD) = BN1(x232) + x219, padded cols zeroed

        # ---- BN1 (training-mode batch stats) + residual: once per core ----
        @pl.when(pl.program_id(1) == 0)
        def _():
            x = x232_ref[...]
            g1, b1 = _unpack(g1b1_ref[...])
            # One-pass sum / sum-of-squares.
            # TODO(synk): one-pass var = E[x^2]-E[x]^2 can cancel badly if |mean|>>std;
            # switch to a shifted/two-pass formulation if this feeds real training data.
            s1 = jnp.sum(x, axis=1, keepdims=True)
            q1 = jnp.sum(x * x, axis=1, keepdims=True)
            mean1 = s1 * inv_p
            var1 = q1 * inv_p - mean1 * mean1          # biased batch variance
            scale1 = jax.lax.rsqrt(var1 + EPS) * g1
            shift1 = b1 - mean1 * scale1
            col = jax.lax.broadcasted_iota(jnp.int32, x.shape, 1)
            # Force padded columns to exactly zero so they contribute nothing to the
            # matmul output nor to the BN2 statistics.
            y_ref[...] = jnp.where(col < p_valid,
                                   x * scale1 + shift1 + x219_ref[...], 0.0)

        # ---- 1x1 conv == channel matmul on the MXU (one COUT slab) ----
        z = jnp.dot(w_ref[...], y_ref[...], preferred_element_type=jnp.float32)

        # ---- BN2 on this slab (per-output-channel stats -> exact under COUT tiling) ----
        g2, b2 = _unpack(g2b2_ref[...])
        s2 = jnp.sum(z, axis=1, keepdims=True)
        q2 = jnp.sum(z * z, axis=1, keepdims=True)
        mean2 = s2 * inv_p
        var2 = q2 * inv_p - mean2 * mean2
        scale2 = jax.lax.rsqrt(var2 + EPS) * g2
        shift2 = b2 - mean2 * scale2
        # Padded output columns hold shift2; the wrapper slices them off.
        o_ref[...] = z * scale2 + shift2

    return kernel


def _pick_cout_blocks(cout: int) -> int:
    # Total COUT slabs: prefer 4 (pipelining + 2 slabs per core on v7x),
    # keep each slab a multiple of 8 sublanes.
    for nblk in (4, 2, 1):
        if cout % nblk == 0 and (cout // nblk) % 8 == 0:
            return nblk
    return 1


def fused_bn_add_conv_bn(x232_nchw, x219_nchw, gamma1, beta1, conv_w, gamma2, beta2):
    """x232/x219: (N, CIN, H, W) f32; conv_w: (COUT, CIN, 1, 1) f32."""
    n, cin, h, w = x232_nchw.shape
    cout = conv_w.shape[0]
    p = n * h * w
    p_pad = max(128, ((p + 127) // 128) * 128)   # lane-dense pixel axis (196 -> 256)

    # Channels-on-sublanes layout: for N == 1 (the module's case) this is a free
    # reshape (no transpose, no data movement).
    if n == 1:
        x232_f = x232_nchw.reshape(cin, p)
        x219_f = x219_nchw.reshape(cin, p)
    else:  # general-N fallback (needs a transpose)
        x232_f = jnp.transpose(x232_nchw, (1, 0, 2, 3)).reshape(cin, p)
        x219_f = jnp.transpose(x219_nchw, (1, 0, 2, 3)).reshape(cin, p)

    if p_pad != p:
        pad = ((0, 0), (0, p_pad - p))
        x232_f = jnp.pad(x232_f, pad)
        x219_f = jnp.pad(x219_f, pad)

    w_mat = conv_w.reshape(cout, cin).astype(jnp.float32)            # matmul LHS
    g1b1 = jnp.stack([gamma1, beta1], axis=1).astype(jnp.float32)    # (CIN, 2)
    g2b2 = jnp.stack([gamma2, beta2], axis=1).astype(jnp.float32)    # (COUT, 2)

    nblk = _pick_cout_blocks(cout)        # total COUT slabs
    outer = 2 if nblk % 2 == 0 else 1     # v7x: half the slabs per TensorCore
    inner = nblk // outer
    cblk = cout // nblk

    cost = pl.CostEstimate(
        flops=2 * cout * cin * p_pad + 10 * p_pad * (outer * cin + cout),
        transcendentals=outer * cin + cout,
        bytes_accessed=4 * (2 * cin * p_pad + cin * cout + cout * p_pad
                            + 2 * (cin + cout)),
    )

    grid_spec = pltpu.PrefetchScalarGridSpec(
        num_scalar_prefetch=0,
        grid=(outer, inner),
        in_specs=[
            pl.BlockSpec((cin, p_pad), lambda i, j: (0, 0)),             # x232 (resident)
            pl.BlockSpec((cin, p_pad), lambda i, j: (0, 0)),             # x219 (resident)
            pl.BlockSpec((cin, 2), lambda i, j: (0, 0)),                 # gamma1|beta1
            pl.BlockSpec((cblk, cin), lambda i, j: (i * inner + j, 0)),  # conv-weight slab
            pl.BlockSpec((cblk, 2), lambda i, j: (i * inner + j, 0)),    # gamma2|beta2 slab
        ],
        out_specs=pl.BlockSpec((cblk, p_pad), lambda i, j: (i * inner + j, 0)),
        scratch_shapes=[pltpu.VMEM((cin, p_pad), jnp.float32)],          # y = BN1(x)+res
    )

    out_flat = pl.pallas_call(
        _make_kernel(p),
        out_shape=jax.ShapeDtypeStruct((cout, p_pad), jnp.float32),
        grid_spec=grid_spec,
        compiler_params=pltpu.CompilerParams(
            dimension_semantics=("parallel", "arbitrary")),
        cost_estimate=cost,
    )(x232_f, x219_f, g1b1, w_mat, g2b2)

    out_valid = out_flat[:, :p]            # drop lane padding
    if n == 1:
        return out_valid.reshape(1, cout, h, w)
    return jnp.transpose(out_valid.reshape(cout, n, h, w), (1, 0, 2, 3))


def _reference(x232, x219, gamma1, beta1, conv_w, gamma2, beta2):
    """Pure-JAX reference matching the PyTorch training-mode forward."""
    def bn(x, g, b):
        m = jnp.mean(x, axis=(0, 2, 3), keepdims=True)
        v = jnp.mean((x - m) ** 2, axis=(0, 2, 3), keepdims=True)
        return (x - m) / jnp.sqrt(v + EPS) * g.reshape(1, -1, 1, 1) + b.reshape(1, -1, 1, 1)

    y = bn(x232, gamma1, beta1) + x219
    z = jax.lax.conv_general_dilated(
        y, conv_w, window_strides=(1, 1), padding="VALID",
        dimension_numbers=("NCHW", "OIHW", "NCHW"))
    return bn(z, gamma2, beta2)


if __name__ == "__main__":
    N, CIN, H, W = 1, 112, 14, 14
    COUT = 672

    key = jax.random.PRNGKey(0)
    k1, k2, k3, k4, k5, k6, k7 = jax.random.split(key, 7)

    x232 = jax.random.normal(k1, (N, CIN, H, W), dtype=jnp.float32)
    x219 = jax.random.normal(k2, (N, CIN, H, W), dtype=jnp.float32)

    # Deterministic synthetic parameters.
    gamma1 = 1.0 + 0.1 * jax.random.normal(k3, (CIN,), dtype=jnp.float32)
    beta1 = 0.1 * jax.random.normal(k4, (CIN,), dtype=jnp.float32)
    conv_w = 0.1 * jax.random.normal(k5, (COUT, CIN, 1, 1), dtype=jnp.float32)
    gamma2 = 1.0 + 0.1 * jax.random.normal(k6, (COUT,), dtype=jnp.float32)
    beta2 = 0.1 * jax.random.normal(k7, (COUT,), dtype=jnp.float32)

    out = fused_bn_add_conv_bn(x232, x219, gamma1, beta1, conv_w, gamma2, beta2)
    out = jax.block_until_ready(out)

    ref = _reference(x232, x219, gamma1, beta1, conv_w, gamma2, beta2)
    assert out.shape == (N, COUT, H, W), out.shape
    err = float(jnp.max(jnp.abs(out - ref)))
    assert jnp.allclose(out, ref, atol=1e-3, rtol=1e-3), err

    # TODO(synk): BatchNorm running_mean/running_var buffer updates (training-time
    # side effect) are not materialized; they could be emitted as extra (C,1) outputs
    # from the already-computed s1/q1/s2/q2 if the surrounding step needs them.
    print("KERNEL_OK")
</pallas_src>

<mosaic_0001>
module attributes {stable_mosaic.version = 11 : i64} {
  func.func @kernel(%arg0: i32, %arg1: i32, %arg2: memref<112x256xf32, #tpu.memory_space<vmem>>, %arg3: memref<112x256xf32, #tpu.memory_space<vmem>>, %arg4: memref<112x2xf32, #tpu.memory_space<vmem>>, %arg5: memref<168x112xf32, #tpu.memory_space<vmem>>, %arg6: memref<168x2xf32, #tpu.memory_space<vmem>>, %arg7: memref<168x256xf32, #tpu.memory_space<vmem>>, %arg8: memref<112x256xf32, #tpu.memory_space<vmem>>) attributes {dimension_semantics = [#tpu.dimension_semantics<parallel>, #tpu.dimension_semantics<arbitrary>], iteration_bounds = array<i64: 2, 2>, scalar_prefetch = 0 : i64, scratch_operands = 1 : i64, tpu.core_type = #tpu.core_type<tc>, window_params = [{pipeline_mode = #tpu.pipeline_mode<synchronous>, transform_indices = @transform_0, window_bounds = array<i64: 112, 256>}, {pipeline_mode = #tpu.pipeline_mode<synchronous>, transform_indices = @transform_1, window_bounds = array<i64: 112, 256>}, {pipeline_mode = #tpu.pipeline_mode<synchronous>, transform_indices = @transform_2, window_bounds = array<i64: 112, 2>}, {transform_indices = @transform_3, window_bounds = array<i64: 168, 112>}, {transform_indices = @transform_4, window_bounds = array<i64: 168, 2>}, {transform_indices = @transform_5, window_bounds = array<i64: 168, 256>}]} {
    %c0_i32 = arith.constant 0 : i32
    %0 = arith.cmpi eq, %arg1, %c0_i32 : i32
    %1 = arith.extui %0 : i1 to i32
    %c0_i32_0 = arith.constant 0 : i32
    %2 = arith.cmpi ne, %1, %c0_i32_0 : i32
    scf.if %2 {
      %c0_18 = arith.constant 0 : index
      %c0_19 = arith.constant 0 : index
      %40 = vector.load %arg2[%c0_18, %c0_19] : memref<112x256xf32, #tpu.memory_space<vmem>>, vector<112x256xf32>
      %c0_20 = arith.constant 0 : index
      %c0_21 = arith.constant 0 : index
      %41 = vector.load %arg4[%c0_20, %c0_21] : memref<112x2xf32, #tpu.memory_space<vmem>>, vector<112x2xf32>
      %42 = tpu.iota {dimensions = array<i32: 1>} : vector<112x2xi32>
      %c0_i32_22 = arith.constant 0 : i32
      %43 = vector.broadcast %c0_i32_22 : i32 to vector<112x2xi32>
      %44 = arith.cmpi eq, %42, %43 : vector<112x2xi32>
      %cst_23 = arith.constant 0.000000e+00 : f32
      %45 = vector.broadcast %cst_23 : f32 to vector<112x2xf32>
      %46 = arith.select %44, %41, %45 : vector<112x2xi1>, vector<112x2xf32>
      %cst_24 = arith.constant dense<0.000000e+00> : vector<112xf32>
      %47 = vector.multi_reduction <add>, %46, %cst_24 [1] : vector<112x2xf32> to vector<112xf32>
      %48 = vector.shape_cast %47 : vector<112xf32> to vector<112x1xf32>
      %cst_25 = arith.constant 0.000000e+00 : f32
      %49 = vector.broadcast %cst_25 : f32 to vector<112x2xf32>
      %50 = arith.select %44, %49, %41 : vector<112x2xi1>, vector<112x2xf32>
      %cst_26 = arith.constant dense<0.000000e+00> : vector<112xf32>
      %51 = vector.multi_reduction <add>, %50, %cst_26 [1] : vector<112x2xf32> to vector<112xf32>
      %52 = vector.shape_cast %51 : vector<112xf32> to vector<112x1xf32>
      %cst_27 = arith.constant dense<0.000000e+00> : vector<112xf32>
      %53 = vector.multi_reduction <add>, %40, %cst_27 [1] : vector<112x256xf32> to vector<112xf32>
      %54 = vector.shape_cast %53 : vector<112xf32> to vector<112x1xf32>
      %55 = arith.mulf %40, %40 : vector<112x256xf32>
      %cst_28 = arith.constant dense<0.000000e+00> : vector<112xf32>
      %56 = vector.multi_reduction <add>, %55, %cst_28 [1] : vector<112x256xf32> to vector<112xf32>
      %57 = vector.shape_cast %56 : vector<112xf32> to vector<112x1xf32>
      %cst_29 = arith.constant 0.00510204071 : f32
      %58 = vector.broadcast %cst_29 : f32 to vector<112x1xf32>
      %59 = arith.mulf %54, %58 : vector<112x1xf32>
      %cst_30 = arith.constant 0.00510204071 : f32
      %60 = vector.broadcast %cst_30 : f32 to vector<112x1xf32>
      %61 = arith.mulf %57, %60 : vector<112x1xf32>
      %62 = arith.mulf %59, %59 : vector<112x1xf32>
      %63 = arith.subf %61, %62 : vector<112x1xf32>
      %cst_31 = arith.constant 9.99999974E-6 : f32
      %64 = vector.broadcast %cst_31 : f32 to vector<112x1xf32>
      %65 = arith.addf %63, %64 : vector<112x1xf32>
      %66 = math.rsqrt %65 : vector<112x1xf32>
      %67 = arith.mulf %66, %48 : vector<112x1xf32>
      %68 = arith.mulf %59, %67 : vector<112x1xf32>
      %69 = arith.subf %52, %68 : vector<112x1xf32>
      %70 = tpu.iota {dimensions = array<i32: 1>} : vector<112x256xi32>
      %c196_i32 = arith.constant 196 : i32
      %71 = vector.broadcast %c196_i32 : i32 to vector<112x256xi32>
      %72 = arith.cmpi slt, %70, %71 : vector<112x256xi32>
      %73 = vector.broadcast %67 : vector<112x1xf32> to vector<112x256xf32>
      %74 = arith.mulf %40, %73 : vector<112x256xf32>
      %75 = vector.broadcast %69 : vector<112x1xf32> to vector<112x256xf32>
      %76 = arith.addf %74, %75 : vector<112x256xf32>
      %c0_32 = arith.constant 0 : index
      %c0_33 = arith.constant 0 : index
      %77 = vector.load %arg3[%c0_32, %c0_33] : memref<112x256xf32, #tpu.memory_space<vmem>>, vector<112x256xf32>
      %78 = arith.addf %76, %77 : vector<112x256xf32>
      %cst_34 = arith.constant 0.000000e+00 : f32
      %79 = vector.broadcast %cst_34 : f32 to vector<112x256xf32>
      %80 = arith.select %72, %78, %79 : vector<112x256xi1>, vector<112x256xf32>
      %c0_35 = arith.constant 0 : index
      %c0_36 = arith.constant 0 : index
      %81 = vector.load %arg8[%c0_35, %c0_36] : memref<112x256xf32, #tpu.memory_space<vmem>>, vector<112x256xf32>
      tpu.vector_store %arg8[%c0_35, %c0_36], %80 {strides = array<i32>} : memref<112x256xf32, #tpu.memory_space<vmem>>, vector<112x256xf32>,
    } else {
    }
    %c0 = arith.constant 0 : index
    %c0_1 = arith.constant 0 : index
    %3 = vector.load %arg5[%c0, %c0_1] : memref<168x112xf32, #tpu.memory_space<vmem>>, vector<168x112xf32>
    %c0_2 = arith.constant 0 : index
    %c0_3 = arith.constant 0 : index
    %4 = vector.load %arg8[%c0_2, %c0_3] : memref<112x256xf32, #tpu.memory_space<vmem>>, vector<112x256xf32>
    %cst = arith.constant dense<0.000000e+00> : vector<168x256xf32>
    %5 = tpu.matmul %3, %4, %cst {dimension_numbers = #tpu.dot_dimension_numbers<[1], [0], [0], [1], [0, 0, 1, 1], [], []>} : vector<168x112xf32>, vector<112x256xf32>, vector<168x256xf32> -> vector<168x256xf32>
    %c0_4 = arith.constant 0 : index
    %c0_5 = arith.constant 0 : index
    %6 = vector.load %arg6[%c0_4, %c0_5] : memref<168x2xf32, #tpu.memory_space<vmem>>, vector<168x2xf32>
    %7 = tpu.iota {dimensions = array<i32: 1>} : vector<168x2xi32>
    %c0_i32_6 = arith.constant 0 : i32
    %8 = vector.broadcast %c0_i32_6 : i32 to vector<168x2xi32>
    %9 = arith.cmpi eq, %7, %8 : vector<168x2xi32>
    %cst_7 = arith.constant 0.000000e+00 : f32
    %10 = vector.broadcast %cst_7 : f32 to vector<168x2xf32>
    %11 = arith.select %9, %6, %10 : vector<168x2xi1>, vector<168x2xf32>
    %cst_8 = arith.constant dense<0.000000e+00> : vector<168xf32>
    %12 = vector.multi_reduction <add>, %11, %cst_8 [1] : vector<168x2xf32> to vector<168xf32>
    %13 = vector.shape_cast %12 : vector<168xf32> to vector<168x1xf32>
    %cst_9 = arith.constant 0.000000e+00 : f32
    %14 = vector.broadcast %cst_9 : f32 to vector<168x2xf32>
    %15 = arith.select %9, %14, %6 : vector<168x2xi1>, vector<168x2xf32>
    %cst_10 = arith.constant dense<0.000000e+00> : vector<168xf32>
    %16 = vector.multi_reduction <add>, %15, %cst_10 [1] : vector<168x2xf32> to vector<168xf32>
    %17 = vector.shape_cast %16 : vector<168xf32> to vector<168x1xf32>
    %cst_11 = arith.constant dense<0.000000e+00> : vector<168xf32>
    %18 = vector.multi_reduction <add>, %5, %cst_11 [1] : vector<168x256xf32> to vector<168xf32>
    %19 = vector.shape_cast %18 : vector<168xf32> to vector<168x1xf32>
    %20 = arith.mulf %5, %5 : vector<168x256xf32>
    %cst_12 = arith.constant dense<0.000000e+00> : vector<168xf32>
    %21 = vector.multi_reduction <add>, %20, %cst_12 [1] : vector<168x256xf32> to vector<168xf32>
    %22 = vector.shape_cast %21 : vector<168xf32> to vector<168x1xf32>
    %cst_13 = arith.constant 0.00510204071 : f32
    %23 = vector.broadcast %cst_13 : f32 to vector<168x1xf32>
    %24 = arith.mulf %19, %23 : vector<168x1xf32>
    %cst_14 = arith.constant 0.00510204071 : f32
    %25 = vector.broadcast %cst_14 : f32 to vector<168x1xf32>
    %26 = arith.mulf %22, %25 : vector<168x1xf32>
    %27 = arith.mulf %24, %24 : vector<168x1xf32>
    %28 = arith.subf %26, %27 : vector<168x1xf32>
    %cst_15 = arith.constant 9.99999974E-6 : f32
    %29 = vector.broadcast %cst_15 : f32 to vector<168x1xf32>
    %30 = arith.addf %28, %29 : vector<168x1xf32>
    %31 = math.rsqrt %30 : vector<168x1xf32>
    %32 = arith.mulf %31, %13 : vector<168x1xf32>
    %33 = arith.mulf %24, %32 : vector<168x1xf32>
    %34 = arith.subf %17, %33 : vector<168x1xf32>
    %35 = vector.broadcast %32 : vector<168x1xf32> to vector<168x256xf32>
    %36 = arith.mulf %5, %35 : vector<168x256xf32>
    %37 = vector.broadcast %34 : vector<168x1xf32> to vector<168x256xf32>
    %38 = arith.addf %36, %37 : vector<168x256xf32>
    %c0_16 = arith.constant 0 : index
    %c0_17 = arith.constant 0 : index
    %39 = vector.load %arg7[%c0_16, %c0_17] : memref<168x256xf32, #tpu.memory_space<vmem>>, vector<168x256xf32>
    tpu.vector_store %arg7[%c0_16, %c0_17], %38 {strides = array<i32>} : memref<168x256xf32, #tpu.memory_space<vmem>>, vector<168x256xf32>,
    return
  }
  func.func @transform_0(%arg0: i32, %arg1: i32) -> (i32, i32) {
    %c0_i32 = arith.constant 0 : i32
    %c0_i32_0 = arith.constant 0 : i32
    %c0_i32_1 = arith.constant 0 : i32
    return %c0_i32, %c0_i32_0 : i32, i32
  }
  func.func @transform_1(%arg0: i32, %arg1: i32) -> (i32, i32) {
    %c0_i32 = arith.constant 0 : i32
    %c0_i32_0 = arith.constant 0 : i32
    %c0_i32_1 = arith.constant 0 : i32
    return %c0_i32, %c0_i32_0 : i32, i32
  }
  func.func @transform_2(%arg0: i32, %arg1: i32) -> (i32, i32) {
    %c0_i32 = arith.constant 0 : i32
    %c0_i32_0 = arith.constant 0 : i32
    %c0_i32_1 = arith.constant 0 : i32
    return %c0_i32, %c0_i32_0 : i32, i32
  }
  func.func @transform_3(%arg0: i32, %arg1: i32) -> (i32, i32) {
    %c2_i32 = arith.constant 2 : i32
    %0 = arith.muli %arg0, %c2_i32 : i32
    %1 = arith.addi %0, %arg1 : i32
    %c0_i32 = arith.constant 0 : i32
    %c0_i32_0 = arith.constant 0 : i32
    return %1, %c0_i32 : i32, i32
  }
  func.func @transform_4(%arg0: i32, %arg1: i32) -> (i32, i32) {
    %c2_i32 = arith.constant 2 : i32
    %0 = arith.muli %arg0, %c2_i32 : i32
    %1 = arith.addi %0, %arg1 : i32
    %c0_i32 = arith.constant 0 : i32
    %c0_i32_0 = arith.constant 0 : i32
    return %1, %c0_i32 : i32, i32
  }
  func.func @transform_5(%arg0: i32, %arg1: i32) -> (i32, i32) {
    %c2_i32 = arith.constant 2 : i32
    %0 = arith.muli %arg0, %c2_i32 : i32
    %1 = arith.addi %0, %arg1 : i32
    %c0_i32 = arith.constant 0 : i32
    %c0_i32_0 = arith.constant 0 : i32
    return %1, %c0_i32 : i32, i32
  }
}

</mosaic_0001>

<llo_original>
// kernel: tpu_custom_call.1
$region0: #{tpu_custom_call.1}
  #allocation0 [shape = 'u32[]', space=smem, size = 0x4, offset = 0x4, fixed_abs, tag = 'smem constant byte address 0x4 - core index']
  #allocation1 [shape = 'u32[144,128]{1,0:T(1,128)}', space=vmem, size = 0x12000, scoped, tag = 'internal scratch']
  #allocation2 [shape = 'f32[112,256]{1,0:T(8,128)}', space=vmem, size = 0x1c000, scoped, tag = 'scratch operand']
  %s0 = inlined_call_operand.hbm [shape: f32[112,256], index: 0, kind: input, shape index: {}]
  %s1 = inlined_call_operand.hbm [shape: f32[112,256], index: 1, kind: input, shape index: {}]
  %s2 = inlined_call_operand.vmem [shape: f32[112,2], index: 2, kind: input, shape index: {}]
  %s3 = inlined_call_operand.vmem [shape: f32[672,112], index: 3, kind: input, shape index: {}]
  %s4 = inlined_call_operand.vmem [shape: f32[672,2], index: 4, kind: input, shape index: {}]
  %s5 = inlined_call_operand.hbm [shape: f32[672,256], index: 5, kind: output, shape index: {}]
  %s6 = sld [smem:[#allocation0]]
  $region65: #{tpu_custom_call.1} parent=0
    _
  %s8 = ssub.s32 1, %s6
  %s9 = scalar_select 0, %s8, %s6
  $region1: #{tpu_custom_call.1} parent=0
    #allocation3 [shape = 'u8[114688]{0}', space=vmem, size = 0x1c000, scoped, tag = 'input window, operand 0, single buffered']
    #allocation4 [shape = 's32[2]{0}', space=sflag, size = 0x8, scoped, tag = 'scoped memory for tpu_custom_call.1']
    #allocation5 [shape = 's32[2]{0}', space=sflag, size = 0x8, scoped, tag = 'scoped memory for tpu_custom_call.1']
    #allocation6 [shape = 'u8[114688]{0}', space=vmem, size = 0x1c000, scoped, tag = 'input window, operand 1, single buffered']
    #allocation7 [shape = 's32[1]{0}', space=sflag, size = 0x4, scoped, tag = 'scoped memory for tpu_custom_call.1']
    #allocation8 [shape = 'u8[344064]{0}', space=vmem, size = 0x54000, scoped, tag = 'output window, operand 0']
    %10 = vsyncpa [#allocation4], 0
    %11 = vsyncpa [#allocation7], 0
    %12 = vsyncpa [#allocation5], 0
    %s13 = scalar_lea.sflag [#allocation5], 1
    %14 = vsyncpa %s13, 0
    loop: start=0, step=1, limit=6
    $region2: #{tpu_custom_call.1} parent=1 // loop_pre_header
      _
    $region3: #{tpu_custom_call.1} parent=1 // loop_header
      %s16 = sphi 0, %s20
      %p17 = scmp.ge.s32.totalorder %s16, 6
      %s23 = sphi 0, %s35
      %s24 = sphi 0, %s31
      %s25 = sphi 0, %s23
      %s26 = sphi 0, %s24
      %s27 = sphi 0, %s25
      %s28 = sphi 0, %s26
      %s36 = sphi 0, %s36
      %s38 = sphi 0, %s36
      %s39 = sphi 0, %s38
      %s53 = sphi 0, %s39
      %s57 = sphi 0, %s57
      %s59 = sphi 0, %s57
      %s60 = sphi 0, %s59
      %s74 = sphi 0, %s60
      %s78 = sphi 0, %s78
      %s80 = sphi 0, %s78
      %s81 = sphi 0, %s80
      %s95 = sphi 0, %s81
      %s105 = sphi 0, %s107
      %s108 = sphi 0, %s105
      %s109 = sphi 0, %s108
      %s125 = sphi 0, %s109
      %s135 = sphi 0, %s137
      %s138 = sphi 0, %s135
      %s139 = sphi 0, %s138
      %s155 = sphi 0, %s139
      %s165 = sphi 0, %s167
      %s168 = sphi 0, %s165
      %s169 = sphi 0, %s168
      %s185 = sphi 0, %s169
    $region4: #{tpu_custom_call.1} parent=1 // loop_header_branch
      %19 = sbr.rel (%p17) target = $region8
    $region5: #{tpu_custom_call.1} parent=1 // loop_body
      %s21 = ssub.s32 %s16, 1
      %s22 = ssub.s32 %s16, 2
      %s29 = sadd.s32 1, %s24
      %p30 = scmp.ge.s32.totalorder %s29, 2
      %s31 = scalar_select %p30, 0, %s29
      %s32 = sadd.s32 1, %s23
      %s33 = scalar_select %p30, %s32, %s23
      %p34 = scmp.ge.s32.totalorder %s33, 2
      %s35 = scalar_select %p34, 0, %s33
      %s37 = sadd.s32 %s36, 1
      %p40 = scmp.eq.s32.totalorder %s16, 3
      %p41 = scmp.ne.s32.totalorder %s36, %s38
      %p42 = scmp.eq.s32.totalorder %s16, 0
      %p43 = por %p41, %p42
      %p44 = scmp.ne.s32.totalorder %s36, %s38
      %p45 = scmp.eq.s32.totalorder %s21, 3
      %p46 = por %p44, %p45
      %p47 = scmp.ne.s32.totalorder %s38, %s39
      %p48 = scmp.eq.s32.totalorder %s21, 0
      %p49 = por %p47, %p48
      %p50 = scmp.ne.s32.totalorder %s38, %s39
      %p51 = scmp.eq.s32.totalorder %s22, 3
      %p52 = por %p50, %p51
      %p54 = scmp.ne.s32.totalorder %s39, %s53
      %p55 = scmp.eq.s32.totalorder %s22, 0
      %p56 = por %p54, %p55
      %s58 = sadd.s32 %s57, 1
      %p61 = scmp.eq.s32.totalorder %s16, 3
      %p62 = scmp.ne.s32.totalorder %s57, %s59
      %p63 = scmp.eq.s32.totalorder %s16, 0
      %p64 = por %p62, %p63
      %p65 = scmp.ne.s32.totalorder %s57, %s59
      %p66 = scmp.eq.s32.totalorder %s21, 3
      %p67 = por %p65, %p66
      %p68 = scmp.ne.s32.totalorder %s59, %s60
      %p69 = scmp.eq.s32.totalorder %s21, 0
      %p70 = por %p68, %p69
      %p71 = scmp.ne.s32.totalorder %s59, %s60
      %p72 = scmp.eq.s32.totalorder %s22, 3
      %p73 = por %p71, %p72
      %p75 = scmp.ne.s32.totalorder %s60, %s74
      %p76 = scmp.eq.s32.totalorder %s22, 0
      %p77 = por %p75, %p76
      %s79 = sadd.s32 %s78, 1
      %p82 = scmp.eq.s32.totalorder %s16, 3
      %p83 = scmp.ne.s32.totalorder %s78, %s80
      %p84 = scmp.eq.s32.totalorder %s16, 0
      %p85 = por %p83, %p84
      %p86 = scmp.ne.s32.totalorder %s78, %s80
      %p87 = scmp.eq.s32.totalorder %s21, 3
      %p88 = por %p86, %p87
      %p89 = scmp.ne.s32.totalorder %s80, %s81
      %p90 = scmp.eq.s32.totalorder %s21, 0
      %p91 = por %p89, %p90
      %p92 = scmp.ne.s32.totalorder %s80, %s81
      %p93 = scmp.eq.s32.totalorder %s22, 3
      %p94 = por %p92, %p93
      %p96 = scmp.ne.s32.totalorder %s81, %s95
      %p97 = scmp.eq.s32.totalorder %s22, 0
      %p98 = por %p96, %p97
      %s99 = smul.u32 %s23, 2
      %s100 = sadd.s32 %s99, %s24
      %s101 = smul.u32 %s35, 2
      %s102 = sadd.s32 %s101, %s31
      %s103 = ssub.s32 %s100, %s102
      %p104 = scmp.eq.s32.totalorder %s103, 0
      %s106 = sadd.s32 %s105, 1
      %s107 = scalar_select %p104, %s105, %s106
      %p110 = pneg %p104
      %p111 = scmp.eq.s32.totalorder %s16, 3
      %p112 = por %p110, %p111
      %p113 = scmp.ne.s32.totalorder %s105, %s108
      %p114 = scmp.eq.s32.totalorder %s16, 0
      %p115 = por %p113, %p114
      %p116 = scmp.ne.s32.totalorder %s105, %s108
      %p117 = scmp.eq.s32.totalorder %s21, 3
      %p118 = por %p116, %p117
      %p119 = scmp.ne.s32.totalorder %s108, %s109
      %p120 = scmp.eq.s32.totalorder %s21, 0
      %p121 = por %p119, %p120
      %p122 = scmp.ne.s32.totalorder %s108, %s109
      %p123 = scmp.eq.s32.totalorder %s22, 3
      %p124 = por %p122, %p123
      %p126 = scmp.ne.s32.totalorder %s109, %s125
      %p127 = scmp.eq.s32.totalorder %s22, 0
      %p128 = por %p126, %p127
      %s129 = smul.u32 %s23, 2
      %s130 = sadd.s32 %s129, %s24
      %s131 = smul.u32 %s35, 2
      %s132 = sadd.s32 %s131, %s31
      %s133 = ssub.s32 %s130, %s132
      %p134 = scmp.eq.s32.totalorder %s133, 0
      %s136 = sadd.s32 %s135, 1
      %s137 = scalar_select %p134, %s135, %s136
      %p140 = pneg %p134
      %p141 = scmp.eq.s32.totalorder %s16, 3
      %p142 = por %p140, %p141
      %p143 = scmp.ne.s32.totalorder %s135, %s138
      %p144 = scmp.eq.s32.totalorder %s16, 0
      %p145 = por %p143, %p144
      %p146 = scmp.ne.s32.totalorder %s135, %s138
      %p147 = scmp.eq.s32.totalorder %s21, 3
      %p148 = por %p146, %p147
      %p149 = scmp.ne.s32.totalorder %s138, %s139
      %p150 = scmp.eq.s32.totalorder %s21, 0
      %p151 = por %p149, %p150
      %p152 = scmp.ne.s32.totalorder %s138, %s139
      %p153 = scmp.eq.s32.totalorder %s22, 3
      %p154 = por %p152, %p153
      %p156 = scmp.ne.s32.totalorder %s139, %s155
      %p157 = scmp.eq.s32.totalorder %s22, 0
      %p158 = por %p156, %p157
      %s159 = smul.u32 %s23, 2
      %s160 = sadd.s32 %s159, %s24
      %s161 = smul.u32 %s35, 2
      %s162 = sadd.s32 %s161, %s31
      %s163 = ssub.s32 %s160, %s162
      %p164 = scmp.eq.s32.totalorder %s163, 0
      %s166 = sadd.s32 %s165, 1
      %s167 = scalar_select %p164, %s165, %s166
      %p170 = pneg %p164
      %p171 = scmp.eq.s32.totalorder %s16, 3
      %p172 = por %p170, %p171
      %p173 = scmp.ne.s32.totalorder %s165, %s168
      %p174 = scmp.eq.s32.totalorder %s16, 0
      %p175 = por %p173, %p174
      %p176 = scmp.ne.s32.totalorder %s165, %s168
      %p177 = scmp.eq.s32.totalorder %s21, 3
      %p178 = por %p176, %p177
      %p179 = scmp.ne.s32.totalorder %s168, %s169
      %p180 = scmp.eq.s32.totalorder %s21, 0
      %p181 = por %p179, %p180
      %p182 = scmp.ne.s32.totalorder %s168, %s169
      %p183 = scmp.eq.s32.totalorder %s22, 3
      %p184 = por %p182, %p183
      %p186 = scmp.ne.s32.totalorder %s169, %s185
      %p187 = scmp.eq.s32.totalorder %s22, 0
      %p188 = por %p186, %p187
      %p189 = scmp.le.s32.totalorder 1, %s16
      %p190 = scmp.lt.s32.totalorder %s16, 5
      %p191 = pnand %p189, %p190
      %p192 = pneg %p191
      // Predicated region
      $region9: #{tpu_custom_call.1} parent=5 // pred_check
        _
      $region10: #{tpu_custom_call.1} parent=5 // pred_check_branch
        %194 = sbr.rel (%p191) target = $region12
      $region11: #{tpu_custom_call.1} parent=5 // pred_region
        %s195 = ssub.s32 %s16, 1
        // Predicated region
        $region13: #{tpu_custom_call.1} parent=11 // pred_check
          %p196 = pneg %p49
        $region14: #{tpu_custom_call.1} parent=11 // pred_check_branch
          %198 = sbr.rel (%p196) target = $region16
        $region15: #{tpu_custom_call.1} parent=11 // pred_region
          %s200 = ssub.s32 3584, 3584
          %201 = vsyncadd [#allocation4], %s200
          %s202 = sshll.u32 [#allocation3], 4
          %s203 = int_to_ptr.vmem [resolvable:$true] %s202
          %208 = dma.hbm_to_vmem [thread:$0]  %s0, 3584, %s203, [#allocation4], 256, 256, 16
        $region16: #{tpu_custom_call.1} parent=11 // pred_fallthru
          _
        // Predicated region
        $region17: #{tpu_custom_call.1} parent=11 // pred_check
          %p209 = pneg %p70
        $region18: #{tpu_custom_call.1} parent=11 // pred_check_branch
          %211 = sbr.rel (%p209) target = $region20
        $region19: #{tpu_custom_call.1} parent=11 // pred_region
          %s213 = ssub.s32 3584, 3584
          %214 = vsyncadd [#allocation7], %s213
          %s215 = sshll.u32 [#allocation6], 4
          %s216 = int_to_ptr.vmem [resolvable:$true] %s215
          %221 = dma.hbm_to_vmem [thread:$0]  %s1, 3584, %s216, [#allocation7], 256, 256, 16
        $region20: #{tpu_custom_call.1} parent=11 // pred_fallthru
          _
        // Predicated region
        $region21: #{tpu_custom_call.1} parent=11 // pred_check
          %p222 = pneg %p91
        $region22: #{tpu_custom_call.1} parent=11 // pred_check_branch
          %224 = sbr.rel (%p222) target = $region24
        $region23: #{tpu_custom_call.1} parent=11 // pred_region
          _
        $region24: #{tpu_custom_call.1} parent=11 // pred_fallthru
          _
      $region12: #{tpu_custom_call.1} parent=5 // pred_fallthru
        _
      %p225 = scmp.lt.s32.totalorder %s16, 4
      // Predicated region
      $region25: #{tpu_custom_call.1} parent=5 // pred_check
        %p226 = pneg %p225
      $region26: #{tpu_custom_call.1} parent=5 // pred_check_branch
        %228 = sbr.rel (%p226) target = $region28
      $region27: #{tpu_custom_call.1} parent=5 // pred_region
        // Predicated region
        $region29: #{tpu_custom_call.1} parent=27 // pred_check
          %p229 = pneg %p115
        $region30: #{tpu_custom_call.1} parent=27 // pred_check_branch
          %231 = sbr.rel (%p229) target = $region32
        $region31: #{tpu_custom_call.1} parent=27 // pred_region
          %s232 = smul.u32 %s23, 2
          %s233 = sadd.s32 %s232, %s24
          %s234 = smul.u32 21, %s233
          %p235 = scmp.lt.s32.totalorder %s234, 83
          %s236 = scalar_select %p235, %s234, 83
          %s237 = smul.addr %s236, 8
          %s238 = scalar_lea.vmem %s3, %s237
          %s239 = smul.u32 %s23, 2
          %s240 = sadd.s32 %s239, %s24
          %s241 = smul.u32 21, %s240
        $region32: #{tpu_custom_call.1} parent=27 // pred_fallthru
          _
        // Predicated region
        $region33: #{tpu_custom_call.1} parent=27 // pred_check
          %p242 = pneg %p145
        $region34: #{tpu_custom_call.1} parent=27 // pred_check_branch
          %244 = sbr.rel (%p242) target = $region36
        $region35: #{tpu_custom_call.1} parent=27 // pred_region
          %s245 = smul.u32 %s23, 2
          %s246 = sadd.s32 %s245, %s24
          %s247 = smul.u32 21, %s246
          %p248 = scmp.lt.s32.totalorder %s247, 83
          %s249 = scalar_select %p248, %s247, 83
          %s250 = smul.addr %s249, 8
          %s251 = scalar_lea.vmem %s4, %s250
          %s252 = smul.u32 %s23, 2
          %s253 = sadd.s32 %s252, %s24
          %s254 = smul.u32 21, %s253
        $region36: #{tpu_custom_call.1} parent=27 // pred_fallthru
          _
      $region28: #{tpu_custom_call.1} parent=5 // pred_fallthru
        _
      %p255 = scmp.le.s32.totalorder 1, %s16
      %p256 = scmp.lt.s32.totalorder %s16, 5
      %p257 = pnand %p255, %p256
      %p258 = pneg %p257
      // Predicated region
      $region37: #{tpu_custom_call.1} parent=5 // pred_check
        _
      $region38: #{tpu_custom_call.1} parent=5 // pred_check_branch
        %260 = sbr.rel (%p257) target = $region40
      $region39: #{tpu_custom_call.1} parent=5 // pred_region
        %s261 = ssub.s32 %s16, 1
        // Predicated region
        $region41: #{tpu_custom_call.1} parent=39 // pred_check
          %p262 = pneg %p49
        $region42: #{tpu_custom_call.1} parent=39 // pred_check_branch
          %264 = sbr.rel (%p262) target = $region44
        $region43: #{tpu_custom_call.1} parent=39 // pred_region
          %265 = dma.done [#allocation4], 3584
        $region44: #{tpu_custom_call.1} parent=39 // pred_fallthru
          _
        // Predicated region
        $region45: #{tpu_custom_call.1} parent=39 // pred_check
          %p266 = pneg %p70
        $region46: #{tpu_custom_call.1} parent=39 // pred_check_branch
          %268 = sbr.rel (%p266) target = $region48
        $region47: #{tpu_custom_call.1} parent=39 // pred_region
          %269 = dma.done [#allocation7], 3584
        $region48: #{tpu_custom_call.1} parent=39 // pred_fallthru
          _
        %p270 = pneg %p49
        %p271 = pneg %p46
        %p272 = pneg %p70
        %p273 = pneg %p67
        %p274 = pneg %p91
        %p275 = pneg %p88
        %s276 = smul.u32 %s25, 2
        %s277 = sadd.s32 %s276, %s26
        %s278 = smul.u32 21, %s277
        %p279 = scmp.lt.s32.totalorder %s278, 83
        %s280 = scalar_select %p279, %s278, 83
        %s281 = smul.addr %s280, 8
        %s282 = scalar_lea.vmem %s3, %s281
        %p283 = pneg %p121
        %p284 = pneg %p118
        %s285 = smul.u32 %s25, 2
        %s286 = sadd.s32 %s285, %s26
        %s287 = smul.u32 21, %s286
        %p288 = scmp.lt.s32.totalorder %s287, 83
        %s289 = scalar_select %p288, %s287, 83
        %s290 = smul.addr %s289, 8
        %s291 = scalar_lea.vmem %s4, %s290
        %p292 = pneg %p151
        %p293 = pneg %p148
        %p294 = pneg %p181
        %p295 = pneg %p178
        %s296 = sand.u32 %s168, 1
        %s297 = scalar_lea.sflag [#allocation5], %s296
        %s298 = sand.u32 %s168, 1
        %s299 = smul.addr %s298, 336
        %s300 = scalar_lea.vmem [#allocation8], %s299
        %s301 = smul.u32 %s25, 2
        %s302 = sadd.s32 %s301, %s26
        %s303 = smul.u32 21, %s302
        %p304 = scmp.lt.s32.totalorder %s303, 83
        %s305 = scalar_select %p304, %s303, 83
        %s306 = smul.addr %s305, 8
        %s307 = scalar_lea.vmem %s3, %s306
        %s308 = smul.u32 %s25, 2
        %s309 = sadd.s32 %s308, %s26
        %s310 = smul.u32 21, %s309
        %s311 = smul.u32 %s25, 2
        %s312 = sadd.s32 %s311, %s26
        %s313 = smul.u32 21, %s312
        %p314 = scmp.lt.s32.totalorder %s313, 83
        %s315 = scalar_select %p314, %s313, 83
        %s316 = smul.addr %s315, 8
        %s317 = scalar_lea.vmem %s4, %s316
        %s318 = smul.u32 %s25, 2
        %s319 = sadd.s32 %s318, %s26
        %s320 = smul.u32 21, %s319
        %s321 = smul.u32 %s25, 2
        %s322 = sadd.s32 %s321, %s26
        %s323 = smul.u32 21, %s322
        %p324 = scmp.eq.s32.totalorder %s26, 0
        // Predicated region
        $region49: #{tpu_custom_call.1} parent=39 // pred_check
          %p325 = pneg %p324
        $region50: #{tpu_custom_call.1} parent=39 // pred_check_branch
          %327 = sbr.rel (%p325) target = $region52
        $region51: #{tpu_custom_call.1} parent=39 // pred_region
          %v328 = vld [vmem:[#allocation3] sm:$0xff]
          %v329 = vld [vmem:[#allocation3 + $0x8] sm:$0xff]
          %v330 = vld [vmem:[#allocation3 + $0x10] sm:$0xff]
          %v331 = vld [vmem:[#allocation3 + $0x18] sm:$0xff]
          %v332 = vld [vmem:[#allocation3 + $0x20] sm:$0xff]
          %v333 = vld [vmem:[#allocation3 + $0x28] sm:$0xff]
          %v334 = vld [vmem:[#allocation3 + $0x30] sm:$0xff]
          %v335 = vld [vmem:[#allocation3 + $0x38] sm:$0xff]
          %v336 = vld [vmem:[#allocation3 + $0x40] sm:$0xff]
          %v337 = vld [vmem:[#allocation3 + $0x48] sm:$0xff]
          %v338 = vld [vmem:[#allocation3 + $0x50] sm:$0xff]
          %v339 = vld [vmem:[#allocation3 + $0x58] sm:$0xff]
          %v340 = vld [vmem:[#allocation3 + $0x60] sm:$0xff]
          %v341 = vld [vmem:[#allocation3 + $0x68] sm:$0xff]
          %v342 = vld [vmem:[#allocation3 + $0x70] sm:$0xff]
          %v343 = vld [vmem:[#allocation3 + $0x78] sm:$0xff]
          %v344 = vld [vmem:[#allocation3 + $0x80] sm:$0xff]
          %v345 = vld [vmem:[#allocation3 + $0x88] sm:$0xff]
          %v346 = vld [vmem:[#allocation3 + $0x90] sm:$0xff]
          %v347 = vld [vmem:[#allocation3 + $0x98] sm:$0xff]
          %v348 = vld [vmem:[#allocation3 + $0xa0] sm:$0xff]
          %v349 = vld [vmem:[#allocation3 + $0xa8] sm:$0xff]
          %v350 = vld [vmem:[#allocation3 + $0xb0] sm:$0xff]
          %v351 = vld [vmem:[#allocation3 + $0xb8] sm:$0xff]
          %v352 = vld [vmem:[#allocation3 + $0xc0] sm:$0xff]
          %v353 = vld [vmem:[#allocation3 + $0xc8] sm:$0xff]
          %v354 = vld [vmem:[#allocation3 + $0xd0] sm:$0xff]
          %v355 = vld [vmem:[#allocation3 + $0xd8] sm:$0xff]
          %v356 = vld [vmem:[%s2] sm:$0xff]
          %v357 = vld [vmem:[%s2 + $0x8] sm:$0xff]
          %v358 = vld [vmem:[%s2 + $0x10] sm:$0xff]
          %v359 = vld [vmem:[%s2 + $0x18] sm:$0xff]
          %v360 = vld [vmem:[%s2 + $0x20] sm:$0xff]
          %v361 = vld [vmem:[%s2 + $0x28] sm:$0xff]
          %v362 = vld [vmem:[%s2 + $0x30] sm:$0xff]
          %v363 = vld [vmem:[%s2 + $0x38] sm:$0xff]
          %v364 = vld [vmem:[%s2 + $0x40] sm:$0xff]
          %v365 = vld [vmem:[%s2 + $0x48] sm:$0xff]
          %v366 = vld [vmem:[%s2 + $0x50] sm:$0xff]
          %v367 = vld [vmem:[%s2 + $0x58] sm:$0xff]
          %v368 = vld [vmem:[%s2 + $0x60] sm:$0xff]
          %v369 = vld [vmem:[%s2 + $0x68] sm:$0xff]
          %v370 = vlaneseq
          %v371 = vand.u32 %v370, 127
          %vm372 = vcmp.eq.s32.totalorder %v371, 0
          %v373 = vsel %vm372, %v356, 0.0
          %v374 = vsel %vm372, %v357, 0.0
          %v375 = vsel %vm372, %v358, 0.0
          %v376 = vsel %vm372, %v359, 0.0
          %v377 = vsel %vm372, %v360, 0.0
          %v378 = vsel %vm372, %v361, 0.0
          %v379 = vsel %vm372, %v362, 0.0
          %v380 = vsel %vm372, %v363, 0.0
          %v381 = vsel %vm372, %v364, 0.0
          %v382 = vsel %vm372, %v365, 0.0
          %v383 = vsel %vm372, %v366, 0.0
          %v384 = vsel %vm372, %v367, 0.0
          %v385 = vsel %vm372, %v368, 0.0
          %v386 = vsel %vm372, %v369, 0.0
          %vm387 = vcmask 15360
          %v388 = vsel %vm387, %v373, 0.0
          %389 = vadd.xlane.f32.xlu0 %v388
          %v390 = vpop.xlane.xlu0 %389
          %v391 = vsel %vm387, %v374, 0.0
          %392 = vadd.xlane.f32.xlu0 %v391
          %v393 = vpop.xlane.xlu0 %392
          %v394 = vsel %vm387, %v375, 0.0
          %395 = vadd.xlane.f32.xlu0 %v394
          %v396 = vpop.xlane.xlu0 %395
          %v397 = vsel %vm387, %v376, 0.0
          %398 = vadd.xlane.f32.xlu0 %v397
          %v399 = vpop.xlane.xlu0 %398
          %v400 = vsel %vm387, %v377, 0.0
          %401 = vadd.xlane.f32.xlu0 %v400
          %v402 = vpop.xlane.xlu0 %401
          %v403 = vsel %vm387, %v378, 0.0
          %404 = vadd.xlane.f32.xlu0 %v403
          %v405 = vpop.xlane.xlu0 %404
          %v406 = vsel %vm387, %v379, 0.0
          %407 = vadd.xlane.f32.xlu0 %v406
          %v408 = vpop.xlane.xlu0 %407
          %v409 = vsel %vm387, %v380, 0.0
          %410 = vadd.xlane.f32.xlu0 %v409
          %v411 = vpop.xlane.xlu0 %410
          %v412 = vsel %vm387, %v381, 0.0
          %413 = vadd.xlane.f32.xlu0 %v412
          %v414 = vpop.xlane.xlu0 %413
          %v415 = vsel %vm387, %v382, 0.0
          %416 = vadd.xlane.f32.xlu0 %v415
          %v417 = vpop.xlane.xlu0 %416
          %v418 = vsel %vm387, %v383, 0.0
          %419 = vadd.xlane.f32.xlu0 %v418
          %v420 = vpop.xlane.xlu0 %419
          %v421 = vsel %vm387, %v384, 0.0
          %422 = vadd.xlane.f32.xlu0 %v421
          %v423 = vpop.xlane.xlu0 %422
          %v424 = vsel %vm387, %v385, 0.0
          %425 = vadd.xlane.f32.xlu0 %v424
          %v426 = vpop.xlane.xlu0 %425
          %v427 = vsel %vm387, %v386, 0.0
          %428 = vadd.xlane.f32.xlu0 %v427
          %v429 = vpop.xlane.xlu0 %428
          %v430 = vsel %vm372, 0.0, %v356
          %v431 = vsel %vm372, 0.0, %v357
          %v432 = vsel %vm372, 0.0, %v358
          %v433 = vsel %vm372, 0.0, %v359
          %v434 = vsel %vm372, 0.0, %v360
          %v435 = vsel %vm372, 0.0, %v361
          %v436 = vsel %vm372, 0.0, %v362
          %v437 = vsel %vm372, 0.0, %v363
          %v438 = vsel %vm372, 0.0, %v364
          %v439 = vsel %vm372, 0.0, %v365
          %v440 = vsel %vm372, 0.0, %v366
          %v441 = vsel %vm372, 0.0, %v367
          %v442 = vsel %vm372, 0.0, %v368
          %v443 = vsel %vm372, 0.0, %v369
          %v444 = vsel %vm387, %v430, 0.0
          %445 = vadd.xlane.f32.xlu0 %v444
          %v446 = vpop.xlane.xlu0 %445
          %v447 = vsel %vm387, %v431, 0.0
          %448 = vadd.xlane.f32.xlu0 %v447
          %v449 = vpop.xlane.xlu0 %448
          %v450 = vsel %vm387, %v432, 0.0
          %451 = vadd.xlane.f32.xlu0 %v450
          %v452 = vpop.xlane.xlu0 %451
          %v453 = vsel %vm387, %v433, 0.0
          %454 = vadd.xlane.f32.xlu0 %v453
          %v455 = vpop.xlane.xlu0 %454
          %v456 = vsel %vm387, %v434, 0.0
          %457 = vadd.xlane.f32.xlu0 %v456
          %v458 = vpop.xlane.xlu0 %457
          %v459 = vsel %vm387, %v435, 0.0
          %460 = vadd.xlane.f32.xlu0 %v459
          %v461 = vpop.xlane.xlu0 %460
          %v462 = vsel %vm387, %v436, 0.0
          %463 = vadd.xlane.f32.xlu0 %v462
          %v464 = vpop.xlane.xlu0 %463
          %v465 = vsel %vm387, %v437, 0.0
          %466 = vadd.xlane.f32.xlu0 %v465
          %v467 = vpop.xlane.xlu0 %466
          %v468 = vsel %vm387, %v438, 0.0
          %469 = vadd.xlane.f32.xlu0 %v468
          %v470 = vpop.xlane.xlu0 %469
          %v471 = vsel %vm387, %v439, 0.0
          %472 = vadd.xlane.f32.xlu0 %v471
          %v473 = vpop.xlane.xlu0 %472
          %v474 = vsel %vm387, %v440, 0.0
          %475 = vadd.xlane.f32.xlu0 %v474
          %v476 = vpop.xlane.xlu0 %475
          %v477 = vsel %vm387, %v441, 0.0
          %478 = vadd.xlane.f32.xlu0 %v477
          %v479 = vpop.xlane.xlu0 %478
          %v480 = vsel %vm387, %v442, 0.0
          %481 = vadd.xlane.f32.xlu0 %v480
          %v482 = vpop.xlane.xlu0 %481
          %v483 = vsel %vm387, %v443, 0.0
          %484 = vadd.xlane.f32.xlu0 %v483
          %v485 = vpop.xlane.xlu0 %484
          %v486 = vadd.f32 %v328, %v329
          %487 = vadd.xlane.f32.xlu0 %v486
          %v488 = vpop.xlane.xlu0 %487
          %v489 = vadd.f32 %v330, %v331
          %490 = vadd.xlane.f32.xlu0 %v489
          %v491 = vpop.xlane.xlu0 %490
          %v492 = vadd.f32 %v332, %v333
          %493 = vadd.xlane.f32.xlu0 %v492
          %v494 = vpop.xlane.xlu0 %493
          %v495 = vadd.f32 %v334, %v335
          %496 = vadd.xlane.f32.xlu0 %v495
          %v497 = vpop.xlane.xlu0 %496
          %v498 = vadd.f32 %v336, %v337
          %499 = vadd.xlane.f32.xlu0 %v498
          %v500 = vpop.xlane.xlu0 %499
          %v501 = vadd.f32 %v338, %v339
          %502 = vadd.xlane.f32.xlu0 %v501
          %v503 = vpop.xlane.xlu0 %502
          %v504 = vadd.f32 %v340, %v341
          %505 = vadd.xlane.f32.xlu0 %v504
          %v506 = vpop.xlane.xlu0 %505
          %v507 = vadd.f32 %v342, %v343
          %508 = vadd.xlane.f32.xlu0 %v507
          %v509 = vpop.xlane.xlu0 %508
          %v510 = vadd.f32 %v344, %v345
          %511 = vadd.xlane.f32.xlu0 %v510
          %v512 = vpop.xlane.xlu0 %511
          %v513 = vadd.f32 %v346, %v347
          %514 = vadd.xlane.f32.xlu0 %v513
          %v515 = vpop.xlane.xlu0 %514
          %v516 = vadd.f32 %v348, %v349
          %517 = vadd.xlane.f32.xlu0 %v516
          %v518 = vpop.xlane.xlu0 %517
          %v519 = vadd.f32 %v350, %v351
          %520 = vadd.xlane.f32.xlu0 %v519
          %v521 = vpop.xlane.xlu0 %520
          %v522 = vadd.f32 %v352, %v353
          %523 = vadd.xlane.f32.xlu0 %v522
          %v524 = vpop.xlane.xlu0 %523
          %v525 = vadd.f32 %v354, %v355
          %526 = vadd.xlane.f32.xlu0 %v525
          %v527 = vpop.xlane.xlu0 %526
          %v528 = vmul.f32 %v328, %v328
          %v529 = vmul.f32 %v329, %v329
          %v530 = vmul.f32 %v330, %v330
          %v531 = vmul.f32 %v331, %v331
          %v532 = vmul.f32 %v332, %v332
          %v533 = vmul.f32 %v333, %v333
          %v534 = vmul.f32 %v334, %v334
          %v535 = vmul.f32 %v335, %v335
          %v536 = vmul.f32 %v336, %v336
          %v537 = vmul.f32 %v337, %v337
          %v538 = vmul.f32 %v338, %v338
          %v539 = vmul.f32 %v339, %v339
          %v540 = vmul.f32 %v340, %v340
          %v541 = vmul.f32 %v341, %v341
          %v542 = vmul.f32 %v342, %v342
          %v543 = vmul.f32 %v343, %v343
          %v544 = vmul.f32 %v344, %v344
          %v545 = vmul.f32 %v345, %v345
          %v546 = vmul.f32 %v346, %v346
          %v547 = vmul.f32 %v347, %v347
          %v548 = vmul.f32 %v348, %v348
          %v549 = vmul.f32 %v349, %v349
          %v550 = vmul.f32 %v350, %v350
          %v551 = vmul.f32 %v351, %v351
          %v552 = vmul.f32 %v352, %v352
          %v553 = vmul.f32 %v353, %v353
          %v554 = vmul.f32 %v354, %v354
          %v555 = vmul.f32 %v355, %v355
          %v556 = vadd.f32 %v528, %v529
          %557 = vadd.xlane.f32.xlu0 %v556
          %v558 = vpop.xlane.xlu0 %557
          %v559 = vadd.f32 %v530, %v531
          %560 = vadd.xlane.f32.xlu0 %v559
          %v561 = vpop.xlane.xlu0 %560
          %v562 = vadd.f32 %v532, %v533
          %563 = vadd.xlane.f32.xlu0 %v562
          %v564 = vpop.xlane.xlu0 %563
          %v565 = vadd.f32 %v534, %v535
          %566 = vadd.xlane.f32.xlu0 %v565
          %v567 = vpop.xlane.xlu0 %566
          %v568 = vadd.f32 %v536, %v537
          %569 = vadd.xlane.f32.xlu0 %v568
          %v570 = vpop.xlane.xlu0 %569
          %v571 = vadd.f32 %v538, %v539
          %572 = vadd.xlane.f32.xlu0 %v571
          %v573 = vpop.xlane.xlu0 %572
          %v574 = vadd.f32 %v540, %v541
          %575 = vadd.xlane.f32.xlu0 %v574
          %v576 = vpop.xlane.xlu0 %575
          %v577 = vadd.f32 %v542, %v543
          %578 = vadd.xlane.f32.xlu0 %v577
          %v579 = vpop.xlane.xlu0 %578
          %v580 = vadd.f32 %v544, %v545
          %581 = vadd.xlane.f32.xlu0 %v580
          %v582 = vpop.xlane.xlu0 %581
          %v583 = vadd.f32 %v546, %v547
          %584 = vadd.xlane.f32.xlu0 %v583
          %v585 = vpop.xlane.xlu0 %584
          %v586 = vadd.f32 %v548, %v549
          %587 = vadd.xlane.f32.xlu0 %v586
          %v588 = vpop.xlane.xlu0 %587
          %v589 = vadd.f32 %v550, %v551
          %590 = vadd.xlane.f32.xlu0 %v589
          %v591 = vpop.xlane.xlu0 %590
          %v592 = vadd.f32 %v552, %v553
          %593 = vadd.xlane.f32.xlu0 %v592
          %v594 = vpop.xlane.xlu0 %593
          %v595 = vadd.f32 %v554, %v555
          %596 = vadd.xlane.f32.xlu0 %v595
          %v597 = vpop.xlane.xlu0 %596
          %v598 = vmul.f32 %v488, 0.0051020407
          %v599 = vmul.f32 %v491, 0.0051020407
          %v600 = vmul.f32 %v494, 0.0051020407
          %v601 = vmul.f32 %v497, 0.0051020407
          %v602 = vmul.f32 %v500, 0.0051020407
          %v603 = vmul.f32 %v503, 0.0051020407
          %v604 = vmul.f32 %v506, 0.0051020407
          %v605 = vmul.f32 %v509, 0.0051020407
          %v606 = vmul.f32 %v512, 0.0051020407
          %v607 = vmul.f32 %v515, 0.0051020407
          %v608 = vmul.f32 %v518, 0.0051020407
          %v609 = vmul.f32 %v521, 0.0051020407
          %v610 = vmul.f32 %v524, 0.0051020407
          %v611 = vmul.f32 %v527, 0.0051020407
          %v612 = vmul.f32 %v558, 0.0051020407
          %v613 = vmul.f32 %v561, 0.0051020407
          %v614 = vmul.f32 %v564, 0.0051020407
          %v615 = vmul.f32 %v567, 0.0051020407
          %v616 = vmul.f32 %v570, 0.0051020407
          %v617 = vmul.f32 %v573, 0.0051020407
          %v618 = vmul.f32 %v576, 0.0051020407
          %v619 = vmul.f32 %v579, 0.0051020407
          %v620 = vmul.f32 %v582, 0.0051020407
          %v621 = vmul.f32 %v585, 0.0051020407
          %v622 = vmul.f32 %v588, 0.0051020407
          %v623 = vmul.f32 %v591, 0.0051020407
          %v624 = vmul.f32 %v594, 0.0051020407
          %v625 = vmul.f32 %v597, 0.0051020407
          %v626 = vmul.f32 %v598, %v598
          %v627 = vmul.f32 %v599, %v599
          %v628 = vmul.f32 %v600, %v600
          %v629 = vmul.f32 %v601, %v601
          %v630 = vmul.f32 %v602, %v602
          %v631 = vmul.f32 %v603, %v603
          %v632 = vmul.f32 %v604, %v604
          %v633 = vmul.f32 %v605, %v605
          %v634 = vmul.f32 %v606, %v606
          %v635 = vmul.f32 %v607, %v607
          %v636 = vmul.f32 %v608, %v608
          %v637 = vmul.f32 %v609, %v609
          %v638 = vmul.f32 %v610, %v610
          %v639 = vmul.f32 %v611, %v611
          %v640 = vsub.f32 %v612, %v626
          %v641 = vsub.f32 %v613, %v627
          %v642 = vsub.f32 %v614, %v628
          %v643 = vsub.f32 %v615, %v629
          %v644 = vsub.f32 %v616, %v630
          %v645 = vsub.f32 %v617, %v631
          %v646 = vsub.f32 %v618, %v632
          %v647 = vsub.f32 %v619, %v633
          %v648 = vsub.f32 %v620, %v634
          %v649 = vsub.f32 %v621, %v635
          %v650 = vsub.f32 %v622, %v636
          %v651 = vsub.f32 %v623, %v637
          %v652 = vsub.f32 %v624, %v638
          %v653 = vsub.f32 %v625, %v639
          %v654 = vadd.f32 %v640, 1e-05
          %v655 = vadd.f32 %v641, 1e-05
          %v656 = vadd.f32 %v642, 1e-05
          %v657 = vadd.f32 %v643, 1e-05
          %v658 = vadd.f32 %v644, 1e-05
          %v659 = vadd.f32 %v645, 1e-05
          %v660 = vadd.f32 %v646, 1e-05
          %v661 = vadd.f32 %v647, 1e-05
          %v662 = vadd.f32 %v648, 1e-05
          %v663 = vadd.f32 %v649, 1e-05
          %v664 = vadd.f32 %v650, 1e-05
          %v665 = vadd.f32 %v651, 1e-05
          %v666 = vadd.f32 %v652, 1e-05
          %v667 = vadd.f32 %v653, 1e-05
          %v668 = vrsqrt.pop %v654
          %v669 = vrsqrt.pop %v655
          %v670 = vrsqrt.pop %v656
          %v671 = vrsqrt.pop %v657
          %v672 = vrsqrt.pop %v658
          %v673 = vrsqrt.pop %v659
          %v674 = vrsqrt.pop %v660
          %v675 = vrsqrt.pop %v661
          %v676 = vrsqrt.pop %v662
          %v677 = vrsqrt.pop %v663
          %v678 = vrsqrt.pop %v664
          %v679 = vrsqrt.pop %v665
          %v680 = vrsqrt.pop %v666
          %v681 = vrsqrt.pop %v667
          %v682 = vmul.f32 %v668, %v390
          %v683 = vmul.f32 %v669, %v393
          %v684 = vmul.f32 %v670, %v396
          %v685 = vmul.f32 %v671, %v399
          %v686 = vmul.f32 %v672, %v402
          %v687 = vmul.f32 %v673, %v405
          %v688 = vmul.f32 %v674, %v408
          %v689 = vmul.f32 %v675, %v411
          %v690 = vmul.f32 %v676, %v414
          %v691 = vmul.f32 %v677, %v417
          %v692 = vmul.f32 %v678, %v420
          %v693 = vmul.f32 %v679, %v423
          %v694 = vmul.f32 %v680, %v426
          %v695 = vmul.f32 %v681, %v429
          %v696 = vmul.f32 %v598, %v682
          %v697 = vmul.f32 %v599, %v683
          %v698 = vmul.f32 %v600, %v684
          %v699 = vmul.f32 %v601, %v685
          %v700 = vmul.f32 %v602, %v686
          %v701 = vmul.f32 %v603, %v687
          %v702 = vmul.f32 %v604, %v688
          %v703 = vmul.f32 %v605, %v689
          %v704 = vmul.f32 %v606, %v690
          %v705 = vmul.f32 %v607, %v691
          %v706 = vmul.f32 %v608, %v692
          %v707 = vmul.f32 %v609, %v693
          %v708 = vmul.f32 %v610, %v694
          %v709 = vmul.f32 %v611, %v695
          %v710 = vsub.f32 %v446, %v696
          %v711 = vsub.f32 %v449, %v697
          %v712 = vsub.f32 %v452, %v698
          %v713 = vsub.f32 %v455, %v699
          %v714 = vsub.f32 %v458, %v700
          %v715 = vsub.f32 %v461, %v701
          %v716 = vsub.f32 %v464, %v702
          %v717 = vsub.f32 %v467, %v703
          %v718 = vsub.f32 %v470, %v704
          %v719 = vsub.f32 %v473, %v705
          %v720 = vsub.f32 %v476, %v706
          %v721 = vsub.f32 %v479, %v707
          %v722 = vsub.f32 %v482, %v708
          %v723 = vsub.f32 %v485, %v709
          %v724 = vadd.s32 %v371, 128
          %vm725 = vcmp.lt.s32.totalorder %v371, 196
          %vm726 = vcmp.lt.s32.totalorder %v724, 196
          %v727 = vmul.f32 %v328, %v682
          %v728 = vmul.f32 %v329, %v682
          %v729 = vmul.f32 %v330, %v683
          %v730 = vmul.f32 %v331, %v683
          %v731 = vmul.f32 %v332, %v684
          %v732 = vmul.f32 %v333, %v684
          %v733 = vmul.f32 %v334, %v685
          %v734 = vmul.f32 %v335, %v685
          %v735 = vmul.f32 %v336, %v686
          %v736 = vmul.f32 %v337, %v686
          %v737 = vmul.f32 %v338, %v687
          %v738 = vmul.f32 %v339, %v687
          %v739 = vmul.f32 %v340, %v688
          %v740 = vmul.f32 %v341, %v688
          %v741 = vmul.f32 %v342, %v689
          %v742 = vmul.f32 %v343, %v689
          %v743 = vmul.f32 %v344, %v690
          %v744 = vmul.f32 %v345, %v690
          %v745 = vmul.f32 %v346, %v691
          %v746 = vmul.f32 %v347, %v691
          %v747 = vmul.f32 %v348, %v692
          %v748 = vmul.f32 %v349, %v692
          %v749 = vmul.f32 %v350, %v693
          %v750 = vmul.f32 %v351, %v693
          %v751 = vmul.f32 %v352, %v694
          %v752 = vmul.f32 %v353, %v694
          %v753 = vmul.f32 %v354, %v695
          %v754 = vmul.f32 %v355, %v695
          %v755 = vadd.f32 %v727, %v710
          %v756 = vadd.f32 %v728, %v710
          %v757 = vadd.f32 %v729, %v711
          %v758 = vadd.f32 %v730, %v711
          %v759 = vadd.f32 %v731, %v712
          %v760 = vadd.f32 %v732, %v712
          %v761 = vadd.f32 %v733, %v713
          %v762 = vadd.f32 %v734, %v713
          %v763 = vadd.f32 %v735, %v714
          %v764 = vadd.f32 %v736, %v714
          %v765 = vadd.f32 %v737, %v715
          %v766 = vadd.f32 %v738, %v715
          %v767 = vadd.f32 %v739, %v716
          %v768 = vadd.f32 %v740, %v716
          %v769 = vadd.f32 %v741, %v717
          %v770 = vadd.f32 %v742, %v717
          %v771 = vadd.f32 %v743, %v718
          %v772 = vadd.f32 %v744, %v718
          %v773 = vadd.f32 %v745, %v719
          %v774 = vadd.f32 %v746, %v719
          %v775 = vadd.f32 %v747, %v720
          %v776 = vadd.f32 %v748, %v720
          %v777 = vadd.f32 %v749, %v721
          %v778 = vadd.f32 %v750, %v721
          %v779 = vadd.f32 %v751, %v722
          %v780 = vadd.f32 %v752, %v722
          %v781 = vadd.f32 %v753, %v723
          %v782 = vadd.f32 %v754, %v723
          %v783 = vld [vmem:[#allocation6] sm:$0xff]
          %v784 = vld [vmem:[#allocation6 + $0x8] sm:$0xff]
          %v785 = vld [vmem:[#allocation6 + $0x10] sm:$0xff]
          %v786 = vld [vmem:[#allocation6 + $0x18] sm:$0xff]
          %v787 = vld [vmem:[#allocation6 + $0x20] sm:$0xff]
          %v788 = vld [vmem:[#allocation6 + $0x28] sm:$0xff]
          %v789 = vld [vmem:[#allocation6 + $0x30] sm:$0xff]
          %v790 = vld [vmem:[#allocation6 + $0x38] sm:$0xff]
          %v791 = vld [vmem:[#allocation6 + $0x40] sm:$0xff]
          %v792 = vld [vmem:[#allocation6 + $0x48] sm:$0xff]
          %v793 = vld [vmem:[#allocation6 + $0x50] sm:$0xff]
          %v794 = vld [vmem:[#allocation6 + $0x58] sm:$0xff]
          %v795 = vld [vmem:[#allocation6 + $0x60] sm:$0xff]
          %v796 = vld [vmem:[#allocation6 + $0x68] sm:$0xff]
          %v797 = vld [vmem:[#allocation6 + $0x70] sm:$0xff]
          %v798 = vld [vmem:[#allocation6 + $0x78] sm:$0xff]
          %v799 = vld [vmem:[#allocation6 + $0x80] sm:$0xff]
          %v800 = vld [vmem:[#allocation6 + $0x88] sm:$0xff]
          %v801 = vld [vmem:[#allocation6 + $0x90] sm:$0xff]
          %v802 = vld [vmem:[#allocation6 + $0x98] sm:$0xff]
          %v803 = vld [vmem:[#allocation6 + $0xa0] sm:$0xff]
          %v804 = vld [vmem:[#allocation6 + $0xa8] sm:$0xff]
          %v805 = vld [vmem:[#allocation6 + $0xb0] sm:$0xff]
          %v806 = vld [vmem:[#allocation6 + $0xb8] sm:$0xff]
          %v807 = vld [vmem:[#allocation6 + $0xc0] sm:$0xff]
          %v808 = vld [vmem:[#allocation6 + $0xc8] sm:$0xff]
          %v809 = vld [vmem:[#allocation6 + $0xd0] sm:$0xff]
          %v810 = vld [vmem:[#allocation6 + $0xd8] sm:$0xff]
          %v811 = vadd.f32 %v755, %v783
          %v812 = vadd.f32 %v756, %v784
          %v813 = vadd.f32 %v757, %v785
          %v814 = vadd.f32 %v758, %v786
          %v815 = vadd.f32 %v759, %v787
          %v816 = vadd.f32 %v760, %v788
          %v817 = vadd.f32 %v761, %v789
          %v818 = vadd.f32 %v762, %v790
          %v819 = vadd.f32 %v763, %v791
          %v820 = vadd.f32 %v764, %v792
          %v821 = vadd.f32 %v765, %v793
          %v822 = vadd.f32 %v766, %v794
          %v823 = vadd.f32 %v767, %v795
          %v824 = vadd.f32 %v768, %v796
          %v825 = vadd.f32 %v769, %v797
          %v826 = vadd.f32 %v770, %v798
          %v827 = vadd.f32 %v771, %v799
          %v828 = vadd.f32 %v772, %v800
          %v829 = vadd.f32 %v773, %v801
          %v830 = vadd.f32 %v774, %v802
          %v831 = vadd.f32 %v775, %v803
          %v832 = vadd.f32 %v776, %v804
          %v833 = vadd.f32 %v777, %v805
          %v834 = vadd.f32 %v778, %v806
          %v835 = vadd.f32 %v779, %v807
          %v836 = vadd.f32 %v780, %v808
          %v837 = vadd.f32 %v781, %v809
          %v838 = vadd.f32 %v782, %v810
          %v839 = vsel %vm725, %v811, 0.0
          %v840 = vsel %vm726, %v812, 0.0
          %v841 = vsel %vm725, %v813, 0.0
          %v842 = vsel %vm726, %v814, 0.0
          %v843 = vsel %vm725, %v815, 0.0
          %v844 = vsel %vm726, %v816, 0.0
          %v845 = vsel %vm725, %v817, 0.0
          %v846 = vsel %vm726, %v818, 0.0
          %v847 = vsel %vm725, %v819, 0.0
          %v848 = vsel %vm726, %v820, 0.0
          %v849 = vsel %vm725, %v821, 0.0
          %v850 = vsel %vm726, %v822, 0.0
          %v851 = vsel %vm725, %v823, 0.0
          %v852 = vsel %vm726, %v824, 0.0
          %v853 = vsel %vm725, %v825, 0.0
          %v854 = vsel %vm726, %v826, 0.0
          %v855 = vsel %vm725, %v827, 0.0
          %v856 = vsel %vm726, %v828, 0.0
          %v857 = vsel %vm725, %v829, 0.0
          %v858 = vsel %vm726, %v830, 0.0
          %v859 = vsel %vm725, %v831, 0.0
          %v860 = vsel %vm726, %v832, 0.0
          %v861 = vsel %vm725, %v833, 0.0
          %v862 = vsel %vm726, %v834, 0.0
          %v863 = vsel %vm725, %v835, 0.0
          %v864 = vsel %vm726, %v836, 0.0
          %v865 = vsel %vm725, %v837, 0.0
          %v866 = vsel %vm726, %v838, 0.0
          %867 = vst [vmem:[#allocation2] sm:$0xff] %v839
          %868 = vst [vmem:[#allocation2 + $0x8] sm:$0xff] %v840
          %869 = vst [vmem:[#allocation2 + $0x10] sm:$0xff] %v841
          %870 = vst [vmem:[#allocation2 + $0x18] sm:$0xff] %v842
          %871 = vst [vmem:[#allocation2 + $0x20] sm:$0xff] %v843
          %872 = vst [vmem:[#allocation2 + $0x28] sm:$0xff] %v844
          %873 = vst [vmem:[#allocation2 + $0x30] sm:$0xff] %v845
          %874 = vst [vmem:[#allocation2 + $0x38] sm:$0xff] %v846
          %875 = vst [vmem:[#allocation2 + $0x40] sm:$0xff] %v847
          %876 = vst [vmem:[#allocation2 + $0x48] sm:$0xff] %v848
          %877 = vst [vmem:[#allocation2 + $0x50] sm:$0xff] %v849
          %878 = vst [vmem:[#allocation2 + $0x58] sm:$0xff] %v850
          %879 = vst [vmem:[#allocation2 + $0x60] sm:$0xff] %v851
          %880 = vst [vmem:[#allocation2 + $0x68] sm:$0xff] %v852
          %881 = vst [vmem:[#allocation2 + $0x70] sm:$0xff] %v853
          %882 = vst [vmem:[#allocation2 + $0x78] sm:$0xff] %v854
          %883 = vst [vmem:[#allocation2 + $0x80] sm:$0xff] %v855
          %884 = vst [vmem:[#allocation2 + $0x88] sm:$0xff] %v856
          %885 = vst [vmem:[#allocation2 + $0x90] sm:$0xff] %v857
          %886 = vst [vmem:[#allocation2 + $0x98] sm:$0xff] %v858
          %887 = vst [vmem:[#allocation2 + $0xa0] sm:$0xff] %v859
          %888 = vst [vmem:[#allocation2 + $0xa8] sm:$0xff] %v860
          %889 = vst [vmem:[#allocation2 + $0xb0] sm:$0xff] %v861
          %890 = vst [vmem:[#allocation2 + $0xb8] sm:$0xff] %v862
          %891 = vst [vmem:[#allocation2 + $0xc0] sm:$0xff] %v863
          %892 = vst [vmem:[#allocation2 + $0xc8] sm:$0xff] %v864
          %893 = vst [vmem:[#allocation2 + $0xd0] sm:$0xff] %v865
          %894 = vst [vmem:[#allocation2 + $0xd8] sm:$0xff] %v866
        $region52: #{tpu_custom_call.1} parent=39 // pred_fallthru
          _
        %v895 = vld [vmem:[%s307] sm:$0xff]
        %v896 = vld [vmem:[%s307 + $0x8] sm:$0xff]
        %v897 = vld [vmem:[%s307 + $0x10] sm:$0xff]
        %v898 = vld [vmem:[%s307 + $0x18] sm:$0xff]
        %v899 = vld [vmem:[%s307 + $0x20] sm:$0xff]
        %v900 = vld [vmem:[%s307 + $0x28] sm:$0xff]
        %v901 = vld [vmem:[%s307 + $0x30] sm:$0xff]
        %v902 = vld [vmem:[%s307 + $0x38] sm:$0xff]
        %v903 = vld [vmem:[%s307 + $0x40] sm:$0xff]
        %v904 = vld [vmem:[%s307 + $0x48] sm:$0xff]
        %v905 = vld [vmem:[%s307 + $0x50] sm:$0xff]
        %v906 = vld [vmem:[%s307 + $0x58] sm:$0xff]
        %v907 = vld [vmem:[%s307 + $0x60] sm:$0xff]
        %v908 = vld [vmem:[%s307 + $0x68] sm:$0xff]
        %v909 = vld [vmem:[%s307 + $0x70] sm:$0xff]
        %v910 = vld [vmem:[%s307 + $0x78] sm:$0xff]
        %v911 = vld [vmem:[%s307 + $0x80] sm:$0xff]
        %v912 = vld [vmem:[%s307 + $0x88] sm:$0xff]
        %v913 = vld [vmem:[%s307 + $0x90] sm:$0xff]
        %v914 = vld [vmem:[%s307 + $0x98] sm:$0xff]
        %v915 = vld [vmem:[%s307 + $0xa0] sm:$0xff]
        %v916 = vld [vmem:[#allocation2] sm:$0xff]
        %v917 = vld [vmem:[#allocation2 + $0x8] sm:$0xff]
        %v918 = vld [vmem:[#allocation2 + $0x10] sm:$0xff]
        %v919 = vld [vmem:[#allocation2 + $0x18] sm:$0xff]
        %v920 = vld [vmem:[#allocation2 + $0x20] sm:$0xff]
        %v921 = vld [vmem:[#allocation2 + $0x28] sm:$0xff]
        %v922 = vld [vmem:[#allocation2 + $0x30] sm:$0xff]
        %v923 = vld [vmem:[#allocation2 + $0x38] sm:$0xff]
        %v924 = vld [vmem:[#allocation2 + $0x40] sm:$0xff]
        %v925 = vld [vmem:[#allocation2 + $0x48] sm:$0xff]
        %v926 = vld [vmem:[#allocation2 + $0x50] sm:$0xff]
        %v927 = vld [vmem:[#allocation2 + $0x58] sm:$0xff]
        %v928 = vld [vmem:[#allocation2 + $0x60] sm:$0xff]
        %v929 = vld [vmem:[#allocation2 + $0x68] sm:$0xff]
        %v930 = vld [vmem:[#allocation2 + $0x70] sm:$0xff]
        %v931 = vld [vmem:[#allocation2 + $0x78] sm:$0xff]
        %v932 = vld [vmem:[#allocation2 + $0x80] sm:$0xff]
        %v933 = vld [vmem:[#allocation2 + $0x88] sm:$0xff]
        %v934 = vld [vmem:[#allocation2 + $0x90] sm:$0xff]
        %v935 = vld [vmem:[#allocation2 + $0x98] sm:$0xff]
        %v936 = vld [vmem:[#allocation2 + $0xa0] sm:$0xff]
        %v937 = vld [vmem:[#allocation2 + $0xa8] sm:$0xff]
        %v938 = vld [vmem:[#allocation2 + $0xb0] sm:$0xff]
        %v939 = vld [vmem:[#allocation2 + $0xb8] sm:$0xff]
        %v940 = vld [vmem:[#allocation2 + $0xc0] sm:$0xff]
        %v941 = vld [vmem:[#allocation2 + $0xc8] sm:$0xff]
        %v942 = vld [vmem:[#allocation2 + $0xd0] sm:$0xff]
        %v943 = vld [vmem:[#allocation2 + $0xd8] sm:$0xff]
        %vm944 = vcmask 916480
        %v946 = vsel %vm944, %v895, 0
        %v949 = vsel %vm944, %v896, 0
        %v952 = vsel %vm944, %v897, 0
        %v955 = vsel %vm944, %v898, 0
        %v958 = vsel %vm944, %v899, 0
        %v961 = vsel %vm944, %v900, 0
        %v964 = vsel %vm944, %v901, 0
        %v967 = vsel %vm944, %v902, 0
        %v970 = vsel %vm944, %v903, 0
        %v973 = vsel %vm944, %v904, 0
        %v976 = vsel %vm944, %v905, 0
        %v979 = vsel %vm944, %v906, 0
        %v982 = vsel %vm944, %v907, 0
        %v985 = vsel %vm944, %v908, 0
        %v988 = vsel %vm944, %v909, 0
        %v991 = vsel %vm944, %v910, 0
        %v994 = vsel %vm944, %v911, 0
        %v997 = vsel %vm944, %v912, 0
        %v1000 = vsel %vm944, %v913, 0
        %v1003 = vsel %vm944, %v914, 0
        %v1006 = vsel %vm944, %v915, 0
        %1008 = vmatprep.subr.mxu0 %v917
        %1009 = vmatpush1.msra.mxu0 %v916
        %1010 = vmatprep.subr.mxu0 %v919
        %1011 = vmatpush1.msra.mxu0 %v918
        %1012 = vmatprep.subr.mxu0 %v921
        %1013 = vmatpush1.msra.mxu0 %v920
        %1014 = vmatprep.subr.mxu0 %v923
        %1015 = vmatpush1.msra.mxu0 %v922
        %1016 = vmatprep.subr.mxu0 %v925
        %1017 = vmatpush1.msra.mxu0 %v924
        %1018 = vmatprep.subr.mxu0 %v927
        %1019 = vmatpush1.msra.mxu0 %v926
        %1020 = vmatprep.subr.mxu0 %v929
        %1021 = vmatpush1.msra.mxu0 %v928
        %1022 = vmatprep.subr.mxu0 %v931
        %1023 = vmatpush1.msra.mxu0 %v930
        %1024 = vmatprep.subr.mxu0 %v933
        %1025 = vmatpush1.msra.mxu0 %v932
        %1026 = vmatprep.subr.mxu0 %v935
        %1027 = vmatpush1.msra.mxu0 %v934
        %1028 = vmatprep.subr.mxu0 %v937
        %1029 = vmatpush1.msra.mxu0 %v936
        %1030 = vmatprep.subr.mxu0 %v939
        %1031 = vmatpush1.msra.mxu0 %v938
        %1032 = vmatprep.subr.mxu0 %v941
        %1033 = vmatpush1.msra.mxu0 %v940
        %1034 = vmatprep.subr.mxu0 %v943
        %1035 = vmatpush1.msra.mxu0 %v942
        %1036 = vmatprep.subr.mxu0 0.0
        %1037 = vmatpush1.msra.mxu0 0.0
        %1038 = vmatprep.subr.mxu0 0.0
        %1039 = vmatpush1.msra.mxu0 0.0
        %1040 = vmatprep.subr.mxu0 0.0
        %1041 = vmatpush1.msra.mxu0 0.0
        %1042 = vmatprep.subr.mxu0 0.0
        %1043 = vmatpush1.msra.mxu0 0.0
        %1044 = vmatprep.subr.mxu0 0.0
        %1045 = vmatpush1.msra.mxu0 0.0
        %1046 = vmatprep.subr.mxu0 0.0
        %1047 = vmatpush1.msra.mxu0 0.0
        %1048 = vmatprep.subr.mxu0 0.0
        %1049 = vmatpush1.msra.mxu0 0.0
        %1050 = vmatprep.subr.mxu0 0.0
        %1051 = vmatpush1.msra.mxu0 0.0
        %1052 = vmatprep.subr.mxu0 0.0
        %1053 = vmatpush1.msra.mxu0 0.0
        %1054 = vmatprep.subr.mxu0 0.0
        %1055 = vmatpush1.msra.mxu0 0.0
        %1056 = vmatprep.subr.mxu0 0.0
        %1057 = vmatpush1.msra.mxu0 0.0
        %1058 = vmatprep.subr.mxu0 0.0
        %1059 = vmatpush1.msra.mxu0 0.0
        %1060 = vmatprep.subr.mxu0 0.0
        %1061 = vmatpush1.msra.mxu0 0.0
        %1062 = vmatprep.subr.mxu0 0.0
        %1063 = vmatpush1.msra.mxu0 0.0
        %1064 = vmatprep.subr.mxu0 0.0
        %1065 = vmatpush1.msra.mxu0 0.0
        %1066 = vmatprep.subr.mxu0 0.0
        %1067 = vmatpush1.msra.mxu0 0.0
        %1068 = vmatprep.subr.mxu0 0.0
        %1069 = vmatpush1.msra.mxu0 0.0
        %1070 = vmatprep.subr.mxu0 0.0
        %1071 = vmatpush1.msra.mxu0 0.0
        %1072 = vmatprep.mubr.f32.mxu0 0.0
        %1073 = vmatmul.mubr.f32.gmra.mrb[0].mxu0 %v946
        %v1074 = vpop.f32.mrb[0].mxu0
        %v1075 = vadd.f32 0.0, %v1074
        %v1076 = vpop.f32.mrb[0].mxu0
        %v1077 = vadd.f32 0.0, %v1076
        %1078 = vmatprep.mubr.f32.mxu0 0.0
        %1079 = vmatmul.mubr.f32.gmra.mrb[0].mxu0 %v949
        %v1080 = vpop.f32.mrb[0].mxu0
        %v1081 = vadd.f32 0.0, %v1080
        %v1082 = vpop.f32.mrb[0].mxu0
        %v1083 = vadd.f32 0.0, %v1082
        %1084 = vmatprep.mubr.f32.mxu0 0.0
        %1085 = vmatmul.mubr.f32.gmra.mrb[0].mxu0 %v952
        %v1086 = vpop.f32.mrb[0].mxu0
        %v1087 = vadd.f32 0.0, %v1086
        %v1088 = vpop.f32.mrb[0].mxu0
        %v1089 = vadd.f32 0.0, %v1088
        %1090 = vmatprep.mubr.f32.mxu0 0.0
        %1091 = vmatmul.mubr.f32.gmra.mrb[0].mxu0 %v955
        %v1092 = vpop.f32.mrb[0].mxu0
        %v1093 = vadd.f32 0.0, %v1092
        %v1094 = vpop.f32.mrb[0].mxu0
        %v1095 = vadd.f32 0.0, %v1094
        %1096 = vmatprep.mubr.f32.mxu0 0.0
        %1097 = vmatmul.mubr.f32.gmra.mrb[0].mxu0 %v958
        %v1098 = vpop.f32.mrb[0].mxu0
        %v1099 = vadd.f32 0.0, %v1098
        %v1100 = vpop.f32.mrb[0].mxu0
        %v1101 = vadd.f32 0.0, %v1100
        %1102 = vmatprep.mubr.f32.mxu0 0.0
        %1103 = vmatmul.mubr.f32.gmra.mrb[0].mxu0 %v961
        %v1104 = vpop.f32.mrb[0].mxu0
        %v1105 = vadd.f32 0.0, %v1104
        %v1106 = vpop.f32.mrb[0].mxu0
        %v1107 = vadd.f32 0.0, %v1106
        %1108 = vmatprep.mubr.f32.mxu0 0.0
        %1109 = vmatmul.mubr.f32.gmra.mrb[0].mxu0 %v964
        %v1110 = vpop.f32.mrb[0].mxu0
        %v1111 = vadd.f32 0.0, %v1110
        %v1112 = vpop.f32.mrb[0].mxu0
        %v1113 = vadd.f32 0.0, %v1112
        %1114 = vmatprep.mubr.f32.mxu0 0.0
        %1115 = vmatmul.mubr.f32.gmra.mrb[0].mxu0 %v967
        %v1116 = vpop.f32.mrb[0].mxu0
        %v1117 = vadd.f32 0.0, %v1116
        %v1118 = vpop.f32.mrb[0].mxu0
        %v1119 = vadd.f32 0.0, %v1118
        %1120 = vmatprep.mubr.f32.mxu0 0.0
        %1121 = vmatmul.mubr.f32.gmra.mrb[0].mxu0 %v970
        %v1122 = vpop.f32.mrb[0].mxu0
        %v1123 = vadd.f32 0.0, %v1122
        %v1124 = vpop.f32.mrb[0].mxu0
        %v1125 = vadd.f32 0.0, %v1124
        %1126 = vmatprep.mubr.f32.mxu0 0.0
        %1127 = vmatmul.mubr.f32.gmra.mrb[0].mxu0 %v973
        %v1128 = vpop.f32.mrb[0].mxu0
        %v1129 = vadd.f32 0.0, %v1128
        %v1130 = vpop.f32.mrb[0].mxu0
        %v1131 = vadd.f32 0.0, %v1130
        %1132 = vmatprep.mubr.f32.mxu0 0.0
        %1133 = vmatmul.mubr.f32.gmra.mrb[0].mxu0 %v976
        %v1134 = vpop.f32.mrb[0].mxu0
        %v1135 = vadd.f32 0.0, %v1134
        %v1136 = vpop.f32.mrb[0].mxu0
        %v1137 = vadd.f32 0.0, %v1136
        %1138 = vmatprep.mubr.f32.mxu0 0.0
        %1139 = vmatmul.mubr.f32.gmra.mrb[0].mxu0 %v979
        %v1140 = vpop.f32.mrb[0].mxu0
        %v1141 = vadd.f32 0.0, %v1140
        %v1142 = vpop.f32.mrb[0].mxu0
        %v1143 = vadd.f32 0.0, %v1142
        %1144 = vmatprep.mubr.f32.mxu0 0.0
        %1145 = vmatmul.mubr.f32.gmra.mrb[0].mxu0 %v982
        %v1146 = vpop.f32.mrb[0].mxu0
        %v1147 = vadd.f32 0.0, %v1146
        %v1148 = vpop.f32.mrb[0].mxu0
        %v1149 = vadd.f32 0.0, %v1148
        %1150 = vmatprep.mubr.f32.mxu0 0.0
        %1151 = vmatmul.mubr.f32.gmra.mrb[0].mxu0 %v985
        %v1152 = vpop.f32.mrb[0].mxu0
        %v1153 = vadd.f32 0.0, %v1152
        %v1154 = vpop.f32.mrb[0].mxu0
        %v1155 = vadd.f32 0.0, %v1154
        %1156 = vmatprep.mubr.f32.mxu0 0.0
        %1157 = vmatmul.mubr.f32.gmra.mrb[0].mxu0 %v988
        %v1158 = vpop.f32.mrb[0].mxu0
        %v1159 = vadd.f32 0.0, %v1158
        %v1160 = vpop.f32.mrb[0].mxu0
        %v1161 = vadd.f32 0.0, %v1160
        %1162 = vmatprep.mubr.f32.mxu0 0.0
        %1163 = vmatmul.mubr.f32.gmra.mrb[0].mxu0 %v991
        %v1164 = vpop.f32.mrb[0].mxu0
        %v1165 = vadd.f32 0.0, %v1164
        %v1166 = vpop.f32.mrb[0].mxu0
        %v1167 = vadd.f32 0.0, %v1166
        %1168 = vmatprep.mubr.f32.mxu0 0.0
        %1169 = vmatmul.mubr.f32.gmra.mrb[0].mxu0 %v994
        %v1170 = vpop.f32.mrb[0].mxu0
        %v1171 = vadd.f32 0.0, %v1170
        %v1172 = vpop.f32.mrb[0].mxu0
        %v1173 = vadd.f32 0.0, %v1172
        %1174 = vmatprep.mubr.f32.mxu0 0.0
        %1175 = vmatmul.mubr.f32.gmra.mrb[0].mxu0 %v997
        %v1176 = vpop.f32.mrb[0].mxu0
        %v1177 = vadd.f32 0.0, %v1176
        %v1178 = vpop.f32.mrb[0].mxu0
        %v1179 = vadd.f32 0.0, %v1178
        %1180 = vmatprep.mubr.f32.mxu0 0.0
        %1181 = vmatmul.mubr.f32.gmra.mrb[0].mxu0 %v1000
        %v1182 = vpop.f32.mrb[0].mxu0
        %v1183 = vadd.f32 0.0, %v1182
        %v1184 = vpop.f32.mrb[0].mxu0
        %v1185 = vadd.f32 0.0, %v1184
        %1186 = vmatprep.mubr.f32.mxu0 0.0
        %1187 = vmatmul.mubr.f32.gmra.mrb[0].mxu0 %v1003
        %v1188 = vpop.f32.mrb[0].mxu0
        %v1189 = vadd.f32 0.0, %v1188
        %v1190 = vpop.f32.mrb[0].mxu0
        %v1191 = vadd.f32 0.0, %v1190
        %1192 = vmatprep.mubr.f32.mxu0 0.0
        %1193 = vmatmul.mubr.f32.gmra.mrb[0].mxu0 %v1006
        %v1194 = vpop.f32.mrb[0].mxu0
        %v1195 = vadd.f32 0.0, %v1194
        %v1196 = vpop.f32.mrb[0].mxu0
        %v1197 = vadd.f32 0.0, %v1196
        %1198 = vdwg.mxu0
        %v1199 = vld [vmem:[%s317] sm:$0xff]
        %v1200 = vld [vmem:[%s317 + $0x8] sm:$0xff]
        %v1201 = vld [vmem:[%s317 + $0x10] sm:$0xff]
        %v1202 = vld [vmem:[%s317 + $0x18] sm:$0xff]
        %v1203 = vld [vmem:[%s317 + $0x20] sm:$0xff]
        %v1204 = vld [vmem:[%s317 + $0x28] sm:$0xff]
        %v1205 = vld [vmem:[%s317 + $0x30] sm:$0xff]
        %v1206 = vld [vmem:[%s317 + $0x38] sm:$0xff]
        %v1207 = vld [vmem:[%s317 + $0x40] sm:$0xff]
        %v1208 = vld [vmem:[%s317 + $0x48] sm:$0xff]
        %v1209 = vld [vmem:[%s317 + $0x50] sm:$0xff]
        %v1210 = vld [vmem:[%s317 + $0x58] sm:$0xff]
        %v1211 = vld [vmem:[%s317 + $0x60] sm:$0xff]
        %v1212 = vld [vmem:[%s317 + $0x68] sm:$0xff]
        %v1213 = vld [vmem:[%s317 + $0x70] sm:$0xff]
        %v1214 = vld [vmem:[%s317 + $0x78] sm:$0xff]
        %v1215 = vld [vmem:[%s317 + $0x80] sm:$0xff]
        %v1216 = vld [vmem:[%s317 + $0x88] sm:$0xff]
        %v1217 = vld [vmem:[%s317 + $0x90] sm:$0xff]
        %v1218 = vld [vmem:[%s317 + $0x98] sm:$0xff]
        %v1219 = vld [vmem:[%s317 + $0xa0] sm:$0xff]
        %v1220 = vlaneseq
        %v1221 = vand.u32 %v1220, 127
        %vm1222 = vcmp.eq.s32.totalorder %v1221, 0
        %v1223 = vsel %vm1222, %v1199, 0.0
        %v1224 = vsel %vm1222, %v1200, 0.0
        %v1225 = vsel %vm1222, %v1201, 0.0
        %v1226 = vsel %vm1222, %v1202, 0.0
        %v1227 = vsel %vm1222, %v1203, 0.0
        %v1228 = vsel %vm1222, %v1204, 0.0
        %v1229 = vsel %vm1222, %v1205, 0.0
        %v1230 = vsel %vm1222, %v1206, 0.0
        %v1231 = vsel %vm1222, %v1207, 0.0
        %v1232 = vsel %vm1222, %v1208, 0.0
        %v1233 = vsel %vm1222, %v1209, 0.0
        %v1234 = vsel %vm1222, %v1210, 0.0
        %v1235 = vsel %vm1222, %v1211, 0.0
        %v1236 = vsel %vm1222, %v1212, 0.0
        %v1237 = vsel %vm1222, %v1213, 0.0
        %v1238 = vsel %vm1222, %v1214, 0.0
        %v1239 = vsel %vm1222, %v1215, 0.0
        %v1240 = vsel %vm1222, %v1216, 0.0
        %v1241 = vsel %vm1222, %v1217, 0.0
        %v1242 = vsel %vm1222, %v1218, 0.0
        %v1243 = vsel %vm1222, %v1219, 0.0
        %vm1244 = vcmask 15360
        %v1245 = vsel %vm1244, %v1223, 0.0
        %1246 = vadd.xlane.f32.xlu0 %v1245
        %v1247 = vpop.xlane.xlu0 %1246
        %v1248 = vsel %vm1244, %v1224, 0.0
        %1249 = vadd.xlane.f32.xlu0 %v1248
        %v1250 = vpop.xlane.xlu0 %1249
        %v1251 = vsel %vm1244, %v1225, 0.0
        %1252 = vadd.xlane.f32.xlu0 %v1251
        %v1253 = vpop.xlane.xlu0 %1252
        %v1254 = vsel %vm1244, %v1226, 0.0
        %1255 = vadd.xlane.f32.xlu0 %v1254
        %v1256 = vpop.xlane.xlu0 %1255
        %v1257 = vsel %vm1244, %v1227, 0.0
        %1258 = vadd.xlane.f32.xlu0 %v1257
        %v1259 = vpop.xlane.xlu0 %1258
        %v1260 = vsel %vm1244, %v1228, 0.0
        %1261 = vadd.xlane.f32.xlu0 %v1260
        %v1262 = vpop.xlane.xlu0 %1261
        %v1263 = vsel %vm1244, %v1229, 0.0
        %1264 = vadd.xlane.f32.xlu0 %v1263
        %v1265 = vpop.xlane.xlu0 %1264
        %v1266 = vsel %vm1244, %v1230, 0.0
        %1267 = vadd.xlane.f32.xlu0 %v1266
        %v1268 = vpop.xlane.xlu0 %1267
        %v1269 = vsel %vm1244, %v1231, 0.0
        %1270 = vadd.xlane.f32.xlu0 %v1269
        %v1271 = vpop.xlane.xlu0 %1270
        %v1272 = vsel %vm1244, %v1232, 0.0
        %1273 = vadd.xlane.f32.xlu0 %v1272
        %v1274 = vpop.xlane.xlu0 %1273
        %v1275 = vsel %vm1244, %v1233, 0.0
        %1276 = vadd.xlane.f32.xlu0 %v1275
        %v1277 = vpop.xlane.xlu0 %1276
        %v1278 = vsel %vm1244, %v1234, 0.0
        %1279 = vadd.xlane.f32.xlu0 %v1278
        %v1280 = vpop.xlane.xlu0 %1279
        %v1281 = vsel %vm1244, %v1235, 0.0
        %1282 = vadd.xlane.f32.xlu0 %v1281
        %v1283 = vpop.xlane.xlu0 %1282
        %v1284 = vsel %vm1244, %v1236, 0.0
        %1285 = vadd.xlane.f32.xlu0 %v1284
        %v1286 = vpop.xlane.xlu0 %1285
        %v1287 = vsel %vm1244, %v1237, 0.0
        %1288 = vadd.xlane.f32.xlu0 %v1287
        %v1289 = vpop.xlane.xlu0 %1288
        %v1290 = vsel %vm1244, %v1238, 0.0
        %1291 = vadd.xlane.f32.xlu0 %v1290
        %v1292 = vpop.xlane.xlu0 %1291
        %v1293 = vsel %vm1244, %v1239, 0.0
        %1294 = vadd.xlane.f32.xlu0 %v1293
        %v1295 = vpop.xlane.xlu0 %1294
        %v1296 = vsel %vm1244, %v1240, 0.0
        %1297 = vadd.xlane.f32.xlu0 %v1296
        %v1298 = vpop.xlane.xlu0 %1297
        %v1299 = vsel %vm1244, %v1241, 0.0
        %1300 = vadd.xlane.f32.xlu0 %v1299
        %v1301 = vpop.xlane.xlu0 %1300
        %v1302 = vsel %vm1244, %v1242, 0.0
        %1303 = vadd.xlane.f32.xlu0 %v1302
        %v1304 = vpop.xlane.xlu0 %1303
        %v1305 = vsel %vm1244, %v1243, 0.0
        %1306 = vadd.xlane.f32.xlu0 %v1305
        %v1307 = vpop.xlane.xlu0 %1306
        %v1308 = vsel %vm1222, 0.0, %v1199
        %v1309 = vsel %vm1222, 0.0, %v1200
        %v1310 = vsel %vm1222, 0.0, %v1201
        %v1311 = vsel %vm1222, 0.0, %v1202
        %v1312 = vsel %vm1222, 0.0, %v1203
        %v1313 = vsel %vm1222, 0.0, %v1204
        %v1314 = vsel %vm1222, 0.0, %v1205
        %v1315 = vsel %vm1222, 0.0, %v1206
        %v1316 = vsel %vm1222, 0.0, %v1207
        %v1317 = vsel %vm1222, 0.0, %v1208
        %v1318 = vsel %vm1222, 0.0, %v1209
        %v1319 = vsel %vm1222, 0.0, %v1210
        %v1320 = vsel %vm1222, 0.0, %v1211
        %v1321 = vsel %vm1222, 0.0, %v1212
        %v1322 = vsel %vm1222, 0.0, %v1213
        %v1323 = vsel %vm1222, 0.0, %v1214
        %v1324 = vsel %vm1222, 0.0, %v1215
        %v1325 = vsel %vm1222, 0.0, %v1216
        %v1326 = vsel %vm1222, 0.0, %v1217
        %v1327 = vsel %vm1222, 0.0, %v1218
        %v1328 = vsel %vm1222, 0.0, %v1219
        %v1329 = vsel %vm1244, %v1308, 0.0
        %1330 = vadd.xlane.f32.xlu0 %v1329
        %v1331 = vpop.xlane.xlu0 %1330
        %v1332 = vsel %vm1244, %v1309, 0.0
        %1333 = vadd.xlane.f32.xlu0 %v1332
        %v1334 = vpop.xlane.xlu0 %1333
        %v1335 = vsel %vm1244, %v1310, 0.0
        %1336 = vadd.xlane.f32.xlu0 %v1335
        %v1337 = vpop.xlane.xlu0 %1336
        %v1338 = vsel %vm1244, %v1311, 0.0
        %1339 = vadd.xlane.f32.xlu0 %v1338
        %v1340 = vpop.xlane.xlu0 %1339
        %v1341 = vsel %vm1244, %v1312, 0.0
        %1342 = vadd.xlane.f32.xlu0 %v1341
        %v1343 = vpop.xlane.xlu0 %1342
        %v1344 = vsel %vm1244, %v1313, 0.0
        %1345 = vadd.xlane.f32.xlu0 %v1344
        %v1346 = vpop.xlane.xlu0 %1345
        %v1347 = vsel %vm1244, %v1314, 0.0
        %1348 = vadd.xlane.f32.xlu0 %v1347
        %v1349 = vpop.xlane.xlu0 %1348
        %v1350 = vsel %vm1244, %v1315, 0.0
        %1351 = vadd.xlane.f32.xlu0 %v1350
        %v1352 = vpop.xlane.xlu0 %1351
        %v1353 = vsel %vm1244, %v1316, 0.0
        %1354 = vadd.xlane.f32.xlu0 %v1353
        %v1355 = vpop.xlane.xlu0 %1354
        %v1356 = vsel %vm1244, %v1317, 0.0
        %1357 = vadd.xlane.f32.xlu0 %v1356
        %v1358 = vpop.xlane.xlu0 %1357
        %v1359 = vsel %vm1244, %v1318, 0.0
        %1360 = vadd.xlane.f32.xlu0 %v1359
        %v1361 = vpop.xlane.xlu0 %1360
        %v1362 = vsel %vm1244, %v1319, 0.0
        %1363 = vadd.xlane.f32.xlu0 %v1362
        %v1364 = vpop.xlane.xlu0 %1363
        %v1365 = vsel %vm1244, %v1320, 0.0
        %1366 = vadd.xlane.f32.xlu0 %v1365
        %v1367 = vpop.xlane.xlu0 %1366
        %v1368 = vsel %vm1244, %v1321, 0.0
        %1369 = vadd.xlane.f32.xlu0 %v1368
        %v1370 = vpop.xlane.xlu0 %1369
        %v1371 = vsel %vm1244, %v1322, 0.0
        %1372 = vadd.xlane.f32.xlu0 %v1371
        %v1373 = vpop.xlane.xlu0 %1372
        %v1374 = vsel %vm1244, %v1323, 0.0
        %1375 = vadd.xlane.f32.xlu0 %v1374
        %v1376 = vpop.xlane.xlu0 %1375
        %v1377 = vsel %vm1244, %v1324, 0.0
        %1378 = vadd.xlane.f32.xlu0 %v1377
        %v1379 = vpop.xlane.xlu0 %1378
        %v1380 = vsel %vm1244, %v1325, 0.0
        %1381 = vadd.xlane.f32.xlu0 %v1380
        %v1382 = vpop.xlane.xlu0 %1381
        %v1383 = vsel %vm1244, %v1326, 0.0
        %1384 = vadd.xlane.f32.xlu0 %v1383
        %v1385 = vpop.xlane.xlu0 %1384
        %v1386 = vsel %vm1244, %v1327, 0.0
        %1387 = vadd.xlane.f32.xlu0 %v1386
        %v1388 = vpop.xlane.xlu0 %1387
        %v1389 = vsel %vm1244, %v1328, 0.0
        %1390 = vadd.xlane.f32.xlu0 %v1389
        %v1391 = vpop.xlane.xlu0 %1390
        %v1392 = vadd.f32 %v1075, %v1077
        %1393 = vadd.xlane.f32.xlu0 %v1392
        %v1394 = vpop.xlane.xlu0 %1393
        %v1395 = vadd.f32 %v1081, %v1083
        %1396 = vadd.xlane.f32.xlu0 %v1395
        %v1397 = vpop.xlane.xlu0 %1396
        %v1398 = vadd.f32 %v1087, %v1089
        %1399 = vadd.xlane.f32.xlu0 %v1398
        %v1400 = vpop.xlane.xlu0 %1399
        %v1401 = vadd.f32 %v1093, %v1095
        %1402 = vadd.xlane.f32.xlu0 %v1401
        %v1403 = vpop.xlane.xlu0 %1402
        %v1404 = vadd.f32 %v1099, %v1101
        %1405 = vadd.xlane.f32.xlu0 %v1404
        %v1406 = vpop.xlane.xlu0 %1405
        %v1407 = vadd.f32 %v1105, %v1107
        %1408 = vadd.xlane.f32.xlu0 %v1407
        %v1409 = vpop.xlane.xlu0 %1408
        %v1410 = vadd.f32 %v1111, %v1113
        %1411 = vadd.xlane.f32.xlu0 %v1410
        %v1412 = vpop.xlane.xlu0 %1411
        %v1413 = vadd.f32 %v1117, %v1119
        %1414 = vadd.xlane.f32.xlu0 %v1413
        %v1415 = vpop.xlane.xlu0 %1414
        %v1416 = vadd.f32 %v1123, %v1125
        %1417 = vadd.xlane.f32.xlu0 %v1416
        %v1418 = vpop.xlane.xlu0 %1417
        %v1419 = vadd.f32 %v1129, %v1131
        %1420 = vadd.xlane.f32.xlu0 %v1419
        %v1421 = vpop.xlane.xlu0 %1420
        %v1422 = vadd.f32 %v1135, %v1137
        %1423 = vadd.xlane.f32.xlu0 %v1422
        %v1424 = vpop.xlane.xlu0 %1423
        %v1425 = vadd.f32 %v1141, %v1143
        %1426 = vadd.xlane.f32.xlu0 %v1425
        %v1427 = vpop.xlane.xlu0 %1426
        %v1428 = vadd.f32 %v1147, %v1149
        %1429 = vadd.xlane.f32.xlu0 %v1428
        %v1430 = vpop.xlane.xlu0 %1429
        %v1431 = vadd.f32 %v1153, %v1155
        %1432 = vadd.xlane.f32.xlu0 %v1431
        %v1433 = vpop.xlane.xlu0 %1432
        %v1434 = vadd.f32 %v1159, %v1161
        %1435 = vadd.xlane.f32.xlu0 %v1434
        %v1436 = vpop.xlane.xlu0 %1435
        %v1437 = vadd.f32 %v1165, %v1167
        %1438 = vadd.xlane.f32.xlu0 %v1437
        %v1439 = vpop.xlane.xlu0 %1438
        %v1440 = vadd.f32 %v1171, %v1173
        %1441 = vadd.xlane.f32.xlu0 %v1440
        %v1442 = vpop.xlane.xlu0 %1441
        %v1443 = vadd.f32 %v1177, %v1179
        %1444 = vadd.xlane.f32.xlu0 %v1443
        %v1445 = vpop.xlane.xlu0 %1444
        %v1446 = vadd.f32 %v1183, %v1185
        %1447 = vadd.xlane.f32.xlu0 %v1446
        %v1448 = vpop.xlane.xlu0 %1447
        %v1449 = vadd.f32 %v1189, %v1191
        %1450 = vadd.xlane.f32.xlu0 %v1449
        %v1451 = vpop.xlane.xlu0 %1450
        %v1452 = vadd.f32 %v1195, %v1197
        %1453 = vadd.xlane.f32.xlu0 %v1452
        %v1454 = vpop.xlane.xlu0 %1453
        %v1455 = vmul.f32 %v1075, %v1075
        %v1456 = vmul.f32 %v1077, %v1077
        %v1457 = vmul.f32 %v1081, %v1081
        %v1458 = vmul.f32 %v1083, %v1083
        %v1459 = vmul.f32 %v1087, %v1087
        %v1460 = vmul.f32 %v1089, %v1089
        %v1461 = vmul.f32 %v1093, %v1093
        %v1462 = vmul.f32 %v1095, %v1095
        %v1463 = vmul.f32 %v1099, %v1099
        %v1464 = vmul.f32 %v1101, %v1101
        %v1465 = vmul.f32 %v1105, %v1105
        %v1466 = vmul.f32 %v1107, %v1107
        %v1467 = vmul.f32 %v1111, %v1111
        %v1468 = vmul.f32 %v1113, %v1113
        %v1469 = vmul.f32 %v1117, %v1117
        %v1470 = vmul.f32 %v1119, %v1119
        %v1471 = vmul.f32 %v1123, %v1123
        %v1472 = vmul.f32 %v1125, %v1125
        %v1473 = vmul.f32 %v1129, %v1129
        %v1474 = vmul.f32 %v1131, %v1131
        %v1475 = vmul.f32 %v1135, %v1135
        %v1476 = vmul.f32 %v1137, %v1137
        %v1477 = vmul.f32 %v1141, %v1141
        %v1478 = vmul.f32 %v1143, %v1143
        %v1479 = vmul.f32 %v1147, %v1147
        %v1480 = vmul.f32 %v1149, %v1149
        %v1481 = vmul.f32 %v1153, %v1153
        %v1482 = vmul.f32 %v1155, %v1155
        %v1483 = vmul.f32 %v1159, %v1159
        %v1484 = vmul.f32 %v1161, %v1161
        %v1485 = vmul.f32 %v1165, %v1165
        %v1486 = vmul.f32 %v1167, %v1167
        %v1487 = vmul.f32 %v1171, %v1171
        %v1488 = vmul.f32 %v1173, %v1173
        %v1489 = vmul.f32 %v1177, %v1177
        %v1490 = vmul.f32 %v1179, %v1179
        %v1491 = vmul.f32 %v1183, %v1183
        %v1492 = vmul.f32 %v1185, %v1185
        %v1493 = vmul.f32 %v1189, %v1189
        %v1494 = vmul.f32 %v1191, %v1191
        %v1495 = vmul.f32 %v1195, %v1195
        %v1496 = vmul.f32 %v1197, %v1197
        %v1497 = vadd.f32 %v1455, %v1456
        %1498 = vadd.xlane.f32.xlu0 %v1497
        %v1499 = vpop.xlane.xlu0 %1498
        %v1500 = vadd.f32 %v1457, %v1458
        %1501 = vadd.xlane.f32.xlu0 %v1500
        %v1502 = vpop.xlane.xlu0 %1501
        %v1503 = vadd.f32 %v1459, %v1460
        %1504 = vadd.xlane.f32.xlu0 %v1503
        %v1505 = vpop.xlane.xlu0 %1504
        %v1506 = vadd.f32 %v1461, %v1462
        %1507 = vadd.xlane.f32.xlu0 %v1506
        %v1508 = vpop.xlane.xlu0 %1507
        %v1509 = vadd.f32 %v1463, %v1464
        %1510 = vadd.xlane.f32.xlu0 %v1509
        %v1511 = vpop.xlane.xlu0 %1510
        %v1512 = vadd.f32 %v1465, %v1466
        %1513 = vadd.xlane.f32.xlu0 %v1512
        %v1514 = vpop.xlane.xlu0 %1513
        %v1515 = vadd.f32 %v1467, %v1468
        %1516 = vadd.xlane.f32.xlu0 %v1515
        %v1517 = vpop.xlane.xlu0 %1516
        %v1518 = vadd.f32 %v1469, %v1470
        %1519 = vadd.xlane.f32.xlu0 %v1518
        %v1520 = vpop.xlane.xlu0 %1519
        %v1521 = vadd.f32 %v1471, %v1472
        %1522 = vadd.xlane.f32.xlu0 %v1521
        %v1523 = vpop.xlane.xlu0 %1522
        %v1524 = vadd.f32 %v1473, %v1474
        %1525 = vadd.xlane.f32.xlu0 %v1524
        %v1526 = vpop.xlane.xlu0 %1525
        %v1527 = vadd.f32 %v1475, %v1476
        %1528 = vadd.xlane.f32.xlu0 %v1527
        %v1529 = vpop.xlane.xlu0 %1528
        %v1530 = vadd.f32 %v1477, %v1478
        %1531 = vadd.xlane.f32.xlu0 %v1530
        %v1532 = vpop.xlane.xlu0 %1531
        %v1533 = vadd.f32 %v1479, %v1480
        %1534 = vadd.xlane.f32.xlu0 %v1533
        %v1535 = vpop.xlane.xlu0 %1534
        %v1536 = vadd.f32 %v1481, %v1482
        %1537 = vadd.xlane.f32.xlu0 %v1536
        %v1538 = vpop.xlane.xlu0 %1537
        %v1539 = vadd.f32 %v1483, %v1484
        %1540 = vadd.xlane.f32.xlu0 %v1539
        %v1541 = vpop.xlane.xlu0 %1540
        %v1542 = vadd.f32 %v1485, %v1486
        %1543 = vadd.xlane.f32.xlu0 %v1542
        %v1544 = vpop.xlane.xlu0 %1543
        %v1545 = vadd.f32 %v1487, %v1488
        %1546 = vadd.xlane.f32.xlu0 %v1545
        %v1547 = vpop.xlane.xlu0 %1546
        %v1548 = vadd.f32 %v1489, %v1490
        %1549 = vadd.xlane.f32.xlu0 %v1548
        %v1550 = vpop.xlane.xlu0 %1549
        %v1551 = vadd.f32 %v1491, %v1492
        %1552 = vadd.xlane.f32.xlu0 %v1551
        %v1553 = vpop.xlane.xlu0 %1552
        %v1554 = vadd.f32 %v1493, %v1494
        %1555 = vadd.xlane.f32.xlu0 %v1554
        %v1556 = vpop.xlane.xlu0 %1555
        %v1557 = vadd.f32 %v1495, %v1496
        %1558 = vadd.xlane.f32.xlu0 %v1557
        %v1559 = vpop.xlane.xlu0 %1558
        %v1560 = vmul.f32 %v1394, 0.0051020407
        %v1561 = vmul.f32 %v1397, 0.0051020407
        %v1562 = vmul.f32 %v1400, 0.0051020407
        %v1563 = vmul.f32 %v1403, 0.0051020407
        %v1564 = vmul.f32 %v1406, 0.0051020407
        %v1565 = vmul.f32 %v1409, 0.0051020407
        %v1566 = vmul.f32 %v1412, 0.0051020407
        %v1567 = vmul.f32 %v1415, 0.0051020407
        %v1568 = vmul.f32 %v1418, 0.0051020407
        %v1569 = vmul.f32 %v1421, 0.0051020407
        %v1570 = vmul.f32 %v1424, 0.0051020407
        %v1571 = vmul.f32 %v1427, 0.0051020407
        %v1572 = vmul.f32 %v1430, 0.0051020407
        %v1573 = vmul.f32 %v1433, 0.0051020407
        %v1574 = vmul.f32 %v1436, 0.0051020407
        %v1575 = vmul.f32 %v1439, 0.0051020407
        %v1576 = vmul.f32 %v1442, 0.0051020407
        %v1577 = vmul.f32 %v1445, 0.0051020407
        %v1578 = vmul.f32 %v1448, 0.0051020407
        %v1579 = vmul.f32 %v1451, 0.0051020407
        %v1580 = vmul.f32 %v1454, 0.0051020407
        %v1581 = vmul.f32 %v1499, 0.0051020407
        %v1582 = vmul.f32 %v1502, 0.0051020407
        %v1583 = vmul.f32 %v1505, 0.0051020407
        %v1584 = vmul.f32 %v1508, 0.0051020407
        %v1585 = vmul.f32 %v1511, 0.0051020407
        %v1586 = vmul.f32 %v1514, 0.0051020407
        %v1587 = vmul.f32 %v1517, 0.0051020407
        %v1588 = vmul.f32 %v1520, 0.0051020407
        %v1589 = vmul.f32 %v1523, 0.0051020407
        %v1590 = vmul.f32 %v1526, 0.0051020407
        %v1591 = vmul.f32 %v1529, 0.0051020407
        %v1592 = vmul.f32 %v1532, 0.0051020407
        %v1593 = vmul.f32 %v1535, 0.0051020407
        %v1594 = vmul.f32 %v1538, 0.0051020407
        %v1595 = vmul.f32 %v1541, 0.0051020407
        %v1596 = vmul.f32 %v1544, 0.0051020407
        %v1597 = vmul.f32 %v1547, 0.0051020407
        %v1598 = vmul.f32 %v1550, 0.0051020407
        %v1599 = vmul.f32 %v1553, 0.0051020407
        %v1600 = vmul.f32 %v1556, 0.0051020407
        %v1601 = vmul.f32 %v1559, 0.0051020407
        %v1602 = vmul.f32 %v1560, %v1560
        %v1603 = vmul.f32 %v1561, %v1561
        %v1604 = vmul.f32 %v1562, %v1562
        %v1605 = vmul.f32 %v1563, %v1563
        %v1606 = vmul.f32 %v1564, %v1564
        %v1607 = vmul.f32 %v1565, %v1565
        %v1608 = vmul.f32 %v1566, %v1566
        %v1609 = vmul.f32 %v1567, %v1567
        %v1610 = vmul.f32 %v1568, %v1568
        %v1611 = vmul.f32 %v1569, %v1569
        %v1612 = vmul.f32 %v1570, %v1570
        %v1613 = vmul.f32 %v1571, %v1571
        %v1614 = vmul.f32 %v1572, %v1572
        %v1615 = vmul.f32 %v1573, %v1573
        %v1616 = vmul.f32 %v1574, %v1574
        %v1617 = vmul.f32 %v1575, %v1575
        %v1618 = vmul.f32 %v1576, %v1576
        %v1619 = vmul.f32 %v1577, %v1577
        %v1620 = vmul.f32 %v1578, %v1578
        %v1621 = vmul.f32 %v1579, %v1579
        %v1622 = vmul.f32 %v1580, %v1580
        %v1623 = vsub.f32 %v1581, %v1602
        %v1624 = vsub.f32 %v1582, %v1603
        %v1625 = vsub.f32 %v1583, %v1604
        %v1626 = vsub.f32 %v1584, %v1605
        %v1627 = vsub.f32 %v1585, %v1606
        %v1628 = vsub.f32 %v1586, %v1607
        %v1629 = vsub.f32 %v1587, %v1608
        %v1630 = vsub.f32 %v1588, %v1609
        %v1631 = vsub.f32 %v1589, %v1610
        %v1632 = vsub.f32 %v1590, %v1611
        %v1633 = vsub.f32 %v1591, %v1612
        %v1634 = vsub.f32 %v1592, %v1613
        %v1635 = vsub.f32 %v1593, %v1614
        %v1636 = vsub.f32 %v1594, %v1615
        %v1637 = vsub.f32 %v1595, %v1616
        %v1638 = vsub.f32 %v1596, %v1617
        %v1639 = vsub.f32 %v1597, %v1618
        %v1640 = vsub.f32 %v1598, %v1619
        %v1641 = vsub.f32 %v1599, %v1620
        %v1642 = vsub.f32 %v1600, %v1621
        %v1643 = vsub.f32 %v1601, %v1622
        %v1644 = vadd.f32 %v1623, 1e-05
        %v1645 = vadd.f32 %v1624, 1e-05
        %v1646 = vadd.f32 %v1625, 1e-05
        %v1647 = vadd.f32 %v1626, 1e-05
        %v1648 = vadd.f32 %v1627, 1e-05
        %v1649 = vadd.f32 %v1628, 1e-05
        %v1650 = vadd.f32 %v1629, 1e-05
        %v1651 = vadd.f32 %v1630, 1e-05
        %v1652 = vadd.f32 %v1631, 1e-05
        %v1653 = vadd.f32 %v1632, 1e-05
        %v1654 = vadd.f32 %v1633, 1e-05
        %v1655 = vadd.f32 %v1634, 1e-05
        %v1656 = vadd.f32 %v1635, 1e-05
        %v1657 = vadd.f32 %v1636, 1e-05
        %v1658 = vadd.f32 %v1637, 1e-05
        %v1659 = vadd.f32 %v1638, 1e-05
        %v1660 = vadd.f32 %v1639, 1e-05
        %v1661 = vadd.f32 %v1640, 1e-05
        %v1662 = vadd.f32 %v1641, 1e-05
        %v1663 = vadd.f32 %v1642, 1e-05
        %v1664 = vadd.f32 %v1643, 1e-05
        %v1665 = vrsqrt.pop %v1644
        %v1666 = vrsqrt.pop %v1645
        %v1667 = vrsqrt.pop %v1646
        %v1668 = vrsqrt.pop %v1647
        %v1669 = vrsqrt.pop %v1648
        %v1670 = vrsqrt.pop %v1649
        %v1671 = vrsqrt.pop %v1650
        %v1672 = vrsqrt.pop %v1651
        %v1673 = vrsqrt.pop %v1652
        %v1674 = vrsqrt.pop %v1653
        %v1675 = vrsqrt.pop %v1654
        %v1676 = vrsqrt.pop %v1655
        %v1677 = vrsqrt.pop %v1656
        %v1678 = vrsqrt.pop %v1657
        %v1679 = vrsqrt.pop %v1658
        %v1680 = vrsqrt.pop %v1659
        %v1681 = vrsqrt.pop %v1660
        %v1682 = vrsqrt.pop %v1661
        %v1683 = vrsqrt.pop %v1662
        %v1684 = vrsqrt.pop %v1663
        %v1685 = vrsqrt.pop %v1664
        %v1686 = vmul.f32 %v1665, %v1247
        %v1687 = vmul.f32 %v1666, %v1250
        %v1688 = vmul.f32 %v1667, %v1253
        %v1689 = vmul.f32 %v1668, %v1256
        %v1690 = vmul.f32 %v1669, %v1259
        %v1691 = vmul.f32 %v1670, %v1262
        %v1692 = vmul.f32 %v1671, %v1265
        %v1693 = vmul.f32 %v1672, %v1268
        %v1694 = vmul.f32 %v1673, %v1271
        %v1695 = vmul.f32 %v1674, %v1274
        %v1696 = vmul.f32 %v1675, %v1277
        %v1697 = vmul.f32 %v1676, %v1280
        %v1698 = vmul.f32 %v1677, %v1283
        %v1699 = vmul.f32 %v1678, %v1286
        %v1700 = vmul.f32 %v1679, %v1289
        %v1701 = vmul.f32 %v1680, %v1292
        %v1702 = vmul.f32 %v1681, %v1295
        %v1703 = vmul.f32 %v1682, %v1298
        %v1704 = vmul.f32 %v1683, %v1301
        %v1705 = vmul.f32 %v1684, %v1304
        %v1706 = vmul.f32 %v1685, %v1307
        %v1707 = vmul.f32 %v1560, %v1686
        %v1708 = vmul.f32 %v1561, %v1687
        %v1709 = vmul.f32 %v1562, %v1688
        %v1710 = vmul.f32 %v1563, %v1689
        %v1711 = vmul.f32 %v1564, %v1690
        %v1712 = vmul.f32 %v1565, %v1691
        %v1713 = vmul.f32 %v1566, %v1692
        %v1714 = vmul.f32 %v1567, %v1693
        %v1715 = vmul.f32 %v1568, %v1694
        %v1716 = vmul.f32 %v1569, %v1695
        %v1717 = vmul.f32 %v1570, %v1696
        %v1718 = vmul.f32 %v1571, %v1697
        %v1719 = vmul.f32 %v1572, %v1698
        %v1720 = vmul.f32 %v1573, %v1699
        %v1721 = vmul.f32 %v1574, %v1700
        %v1722 = vmul.f32 %v1575, %v1701
        %v1723 = vmul.f32 %v1576, %v1702
        %v1724 = vmul.f32 %v1577, %v1703
        %v1725 = vmul.f32 %v1578, %v1704
        %v1726 = vmul.f32 %v1579, %v1705
        %v1727 = vmul.f32 %v1580, %v1706
        %v1728 = vsub.f32 %v1331, %v1707
        %v1729 = vsub.f32 %v1334, %v1708
        %v1730 = vsub.f32 %v1337, %v1709
        %v1731 = vsub.f32 %v1340, %v1710
        %v1732 = vsub.f32 %v1343, %v1711
        %v1733 = vsub.f32 %v1346, %v1712
        %v1734 = vsub.f32 %v1349, %v1713
        %v1735 = vsub.f32 %v1352, %v1714
        %v1736 = vsub.f32 %v1355, %v1715
        %v1737 = vsub.f32 %v1358, %v1716
        %v1738 = vsub.f32 %v1361, %v1717
        %v1739 = vsub.f32 %v1364, %v1718
        %v1740 = vsub.f32 %v1367, %v1719
        %v1741 = vsub.f32 %v1370, %v1720
        %v1742 = vsub.f32 %v1373, %v1721
        %v1743 = vsub.f32 %v1376, %v1722
        %v1744 = vsub.f32 %v1379, %v1723
        %v1745 = vsub.f32 %v1382, %v1724
        %v1746 = vsub.f32 %v1385, %v1725
        %v1747 = vsub.f32 %v1388, %v1726
        %v1748 = vsub.f32 %v1391, %v1727
        %v1749 = vmul.f32 %v1075, %v1686
        %v1750 = vmul.f32 %v1077, %v1686
        %v1751 = vmul.f32 %v1081, %v1687
        %v1752 = vmul.f32 %v1083, %v1687
        %v1753 = vmul.f32 %v1087, %v1688
        %v1754 = vmul.f32 %v1089, %v1688
        %v1755 = vmul.f32 %v1093, %v1689
        %v1756 = vmul.f32 %v1095, %v1689
        %v1757 = vmul.f32 %v1099, %v1690
        %v1758 = vmul.f32 %v1101, %v1690
        %v1759 = vmul.f32 %v1105, %v1691
        %v1760 = vmul.f32 %v1107, %v1691
        %v1761 = vmul.f32 %v1111, %v1692
        %v1762 = vmul.f32 %v1113, %v1692
        %v1763 = vmul.f32 %v1117, %v1693
        %v1764 = vmul.f32 %v1119, %v1693
        %v1765 = vmul.f32 %v1123, %v1694
        %v1766 = vmul.f32 %v1125, %v1694
        %v1767 = vmul.f32 %v1129, %v1695
        %v1768 = vmul.f32 %v1131, %v1695
        %v1769 = vmul.f32 %v1135, %v1696
        %v1770 = vmul.f32 %v1137, %v1696
        %v1771 = vmul.f32 %v1141, %v1697
        %v1772 = vmul.f32 %v1143, %v1697
        %v1773 = vmul.f32 %v1147, %v1698
        %v1774 = vmul.f32 %v1149, %v1698
        %v1775 = vmul.f32 %v1153, %v1699
        %v1776 = vmul.f32 %v1155, %v1699
        %v1777 = vmul.f32 %v1159, %v1700
        %v1778 = vmul.f32 %v1161, %v1700
        %v1779 = vmul.f32 %v1165, %v1701
        %v1780 = vmul.f32 %v1167, %v1701
        %v1781 = vmul.f32 %v1171, %v1702
        %v1782 = vmul.f32 %v1173, %v1702
        %v1783 = vmul.f32 %v1177, %v1703
        %v1784 = vmul.f32 %v1179, %v1703
        %v1785 = vmul.f32 %v1183, %v1704
        %v1786 = vmul.f32 %v1185, %v1704
        %v1787 = vmul.f32 %v1189, %v1705
        %v1788 = vmul.f32 %v1191, %v1705
        %v1789 = vmul.f32 %v1195, %v1706
        %v1790 = vmul.f32 %v1197, %v1706
        %v1791 = vadd.f32 %v1749, %v1728
        %v1792 = vadd.f32 %v1750, %v1728
        %v1793 = vadd.f32 %v1751, %v1729
        %v1794 = vadd.f32 %v1752, %v1729
        %v1795 = vadd.f32 %v1753, %v1730
        %v1796 = vadd.f32 %v1754, %v1730
        %v1797 = vadd.f32 %v1755, %v1731
        %v1798 = vadd.f32 %v1756, %v1731
        %v1799 = vadd.f32 %v1757, %v1732
        %v1800 = vadd.f32 %v1758, %v1732
        %v1801 = vadd.f32 %v1759, %v1733
        %v1802 = vadd.f32 %v1760, %v1733
        %v1803 = vadd.f32 %v1761, %v1734
        %v1804 = vadd.f32 %v1762, %v1734
        %v1805 = vadd.f32 %v1763, %v1735
        %v1806 = vadd.f32 %v1764, %v1735
        %v1807 = vadd.f32 %v1765, %v1736
        %v1808 = vadd.f32 %v1766, %v1736
        %v1809 = vadd.f32 %v1767, %v1737
        %v1810 = vadd.f32 %v1768, %v1737
        %v1811 = vadd.f32 %v1769, %v1738
        %v1812 = vadd.f32 %v1770, %v1738
        %v1813 = vadd.f32 %v1771, %v1739
        %v1814 = vadd.f32 %v1772, %v1739
        %v1815 = vadd.f32 %v1773, %v1740
        %v1816 = vadd.f32 %v1774, %v1740
        %v1817 = vadd.f32 %v1775, %v1741
        %v1818 = vadd.f32 %v1776, %v1741
        %v1819 = vadd.f32 %v1777, %v1742
        %v1820 = vadd.f32 %v1778, %v1742
        %v1821 = vadd.f32 %v1779, %v1743
        %v1822 = vadd.f32 %v1780, %v1743
        %v1823 = vadd.f32 %v1781, %v1744
        %v1824 = vadd.f32 %v1782, %v1744
        %v1825 = vadd.f32 %v1783, %v1745
        %v1826 = vadd.f32 %v1784, %v1745
        %v1827 = vadd.f32 %v1785, %v1746
        %v1828 = vadd.f32 %v1786, %v1746
        %v1829 = vadd.f32 %v1787, %v1747
        %v1830 = vadd.f32 %v1788, %v1747
        %v1831 = vadd.f32 %v1789, %v1748
        %v1832 = vadd.f32 %v1790, %v1748
        %1833 = vst [vmem:[%s300] sm:$0xff] %v1791
        %1834 = vst [vmem:[%s300 + $0x8] sm:$0xff] %v1792
        %1835 = vst [vmem:[%s300 + $0x10] sm:$0xff] %v1793
        %1836 = vst [vmem:[%s300 + $0x18] sm:$0xff] %v1794
        %1837 = vst [vmem:[%s300 + $0x20] sm:$0xff] %v1795
        %1838 = vst [vmem:[%s300 + $0x28] sm:$0xff] %v1796
        %1839 = vst [vmem:[%s300 + $0x30] sm:$0xff] %v1797
        %1840 = vst [vmem:[%s300 + $0x38] sm:$0xff] %v1798
        %1841 = vst [vmem:[%s300 + $0x40] sm:$0xff] %v1799
        %1842 = vst [vmem:[%s300 + $0x48] sm:$0xff] %v1800
        %1843 = vst [vmem:[%s300 + $0x50] sm:$0xff] %v1801
        %1844 = vst [vmem:[%s300 + $0x58] sm:$0xff] %v1802
        %1845 = vst [vmem:[%s300 + $0x60] sm:$0xff] %v1803
        %1846 = vst [vmem:[%s300 + $0x68] sm:$0xff] %v1804
        %1847 = vst [vmem:[%s300 + $0x70] sm:$0xff] %v1805
        %1848 = vst [vmem:[%s300 + $0x78] sm:$0xff] %v1806
        %1849 = vst [vmem:[%s300 + $0x80] sm:$0xff] %v1807
        %1850 = vst [vmem:[%s300 + $0x88] sm:$0xff] %v1808
        %1851 = vst [vmem:[%s300 + $0x90] sm:$0xff] %v1809
        %1852 = vst [vmem:[%s300 + $0x98] sm:$0xff] %v1810
        %1853 = vst [vmem:[%s300 + $0xa0] sm:$0xff] %v1811
        %1854 = vst [vmem:[%s300 + $0xa8] sm:$0xff] %v1812
        %1855 = vst [vmem:[%s300 + $0xb0] sm:$0xff] %v1813
        %1856 = vst [vmem:[%s300 + $0xb8] sm:$0xff] %v1814
        %1857 = vst [vmem:[%s300 + $0xc0] sm:$0xff] %v1815
        %1858 = vst [vmem:[%s300 + $0xc8] sm:$0xff] %v1816
        %1859 = vst [vmem:[%s300 + $0xd0] sm:$0xff] %v1817
        %1860 = vst [vmem:[%s300 + $0xd8] sm:$0xff] %v1818
        %1861 = vst [vmem:[%s300 + $0xe0] sm:$0xff] %v1819
        %1862 = vst [vmem:[%s300 + $0xe8] sm:$0xff] %v1820
        %1863 = vst [vmem:[%s300 + $0xf0] sm:$0xff] %v1821
        %1864 = vst [vmem:[%s300 + $0xf8] sm:$0xff] %v1822
        %1865 = vst [vmem:[%s300 + $0x100] sm:$0xff] %v1823
        %1866 = vst [vmem:[%s300 + $0x108] sm:$0xff] %v1824
        %1867 = vst [vmem:[%s300 + $0x110] sm:$0xff] %v1825
        %1868 = vst [vmem:[%s300 + $0x118] sm:$0xff] %v1826
        %1869 = vst [vmem:[%s300 + $0x120] sm:$0xff] %v1827
        %1870 = vst [vmem:[%s300 + $0x128] sm:$0xff] %v1828
        %1871 = vst [vmem:[%s300 + $0x130] sm:$0xff] %v1829
        %1872 = vst [vmem:[%s300 + $0x138] sm:$0xff] %v1830
        %1873 = vst [vmem:[%s300 + $0x140] sm:$0xff] %v1831
        %1874 = vst [vmem:[%s300 + $0x148] sm:$0xff] %v1832
        %s1875 = sand.u32 %s168, 1
        %s1876 = scalar_lea.sflag [#allocation5], %s1875
        %s1877 = sand.u32 %s168, 1
        %s1878 = smul.addr %s1877, 336
        %s1879 = scalar_lea.vmem [#allocation8], %s1878
        // Predicated region
        $region53: #{tpu_custom_call.1} parent=39 // pred_check
          %p1880 = pneg %p178
        $region54: #{tpu_custom_call.1} parent=39 // pred_check_branch
          %1882 = sbr.rel (%p1880) target = $region56
        $region55: #{tpu_custom_call.1} parent=39 // pred_region
          %s1883 = smul.u32 %s25, 2
          %s1884 = sadd.s32 %s1883, %s26
          %s1885 = smul.u32 21, %s1884
          %s1887 = ssub.s32 5376, 5376
          %1888 = vsyncadd %s1876, %s1887
          %s1889 = smul.addr %s1885, 2
          %s1890 = smul.addr %s1889, 128
          %s1891 = scalar_lea.hbm %s5, %s1890
          %s1892 = sshll.u32 %s1879, 4
          %s1893 = int_to_ptr.vmem [resolvable:$true] %s1892
          %1898 = dma.vmem_to_hbm [thread:$0]  %s1893, 5376, %s1891, %s1876, 256, 256, 16
        $region56: #{tpu_custom_call.1} parent=39 // pred_fallthru
          _
      $region40: #{tpu_custom_call.1} parent=5 // pred_fallthru
        _
      %p1899 = scmp.le.s32.totalorder 2, %s16
      // Predicated region
      $region57: #{tpu_custom_call.1} parent=5 // pred_check
        %p1900 = pneg %p1899
      $region58: #{tpu_custom_call.1} parent=5 // pred_check_branch
        %1902 = sbr.rel (%p1900) target = $region60
      $region59: #{tpu_custom_call.1} parent=5 // pred_region
        %s1903 = ssub.s32 %s16, 2
        // Predicated region
        $region61: #{tpu_custom_call.1} parent=59 // pred_check
          %p1904 = pneg %p184
        $region62: #{tpu_custom_call.1} parent=59 // pred_check_branch
          %1906 = sbr.rel (%p1904) target = $region64
        $region63: #{tpu_custom_call.1} parent=59 // pred_region
          %s1907 = sand.u32 %s169, 1
          %s1908 = scalar_lea.sflag [#allocation5], %s1907
          %s1909 = sand.u32 %s169, 1
          %s1910 = smul.addr %s1909, 336
          %s1911 = scalar_lea.vmem [#allocation8], %s1910
          %1912 = dma.done %s1908, 5376
        $region64: #{tpu_custom_call.1} parent=59 // pred_fallthru
          _
      $region60: #{tpu_custom_call.1} parent=5 // pred_fallthru
        _
    $region6: #{tpu_custom_call.1} parent=1 // loop_footer
      %s20 = sadd.s32 1, %s16
    $region7: #{tpu_custom_call.1} parent=1 // loop_footer_branch
      %15 = sbr.rel target = $region3
    $region8: #{tpu_custom_call.1} parent=1 // loop_exit
      _
    %1913 = vsyncpa [#allocation4], 1
    %s1914 = scalar_lea.sflag [#allocation4], 1
    %1915 = vsyncpa %s1914, 1
    %1916 = vsyncpa [#allocation7], 1
    %1917 = vsyncpa [#allocation5], 1
    %s1918 = scalar_lea.sflag [#allocation5], 1
    %1919 = vsyncpa %s1918, 1

</llo_original>
